<compile_context>
chip_gen: v7x
topology: tpu7x:2x2x1
jax: 0.10.0
libtpu: 0.0.40
codegen_flags: <defaults>
</compile_context>

<pallas_src>
import jax
import jax.numpy as jnp
from jax.experimental import pallas as pl
from jax.experimental.pallas import tpu as pltpu


_MIN_PALLAS_ELEMENTS = 4096   # below this, pure-JAX is cheaper than a kernel launch
_TM_TARGET = 512              # rows per block for large inputs (multiple of 8 and 128)


def _round_up(v: int, m: int) -> int:
    return ((v + m - 1) // m) * m


def _energy_kernel(x_ref, o_ref):
    # x_ref: (TM, spf) block in VMEM ; o_ref: (1, TM) lane-dense block in VMEM
    x = x_ref[...].astype(jnp.float32)                    # (TM, S)
    n = x.shape[-1]                                       # static samples_per_frame
    # Pivot on the first sample of each frame: variance is shift-invariant, and
    # this removes any DC offset so the fused single-pass formula below does not
    # suffer catastrophic cancellation in f32.
    pivot = x[:, 0:1]                                     # (TM, 1)
    y = x - pivot
    s1 = jnp.sum(y, axis=-1)                              # (TM,)
    s2 = jnp.sum(y * y, axis=-1)                          # (TM,)
    # unbiased sample variance (torch.var default: correction = 1)
    var = (s2 - s1 * s1 * (1.0 / n)) * (1.0 / (n - 1))
    o_ref[...] = var[None, :].astype(o_ref.dtype)         # (1, TM) lane-dense store


def energy_estimator(x: jnp.ndarray,
                     sample_rate: int = 16000,
                     frame_length_ms: int = 20) -> jnp.ndarray:
    """JAX/Pallas equivalent of EnergyEstimator.forward."""
    samples_per_frame = int(sample_rate // (1 / frame_length_ms * 1000))
    spf = samples_per_frame
    # NOTE: spf == 1 reproduces torch.var(ddof=1)'s divide-by-zero (inf/nan) behavior.

    *lead, total = x.shape
    n_frames = total // spf

    if n_frames == 0:
        # Input shorter than one frame -> empty frame axis (parity with the module).
        return jnp.zeros((*lead, 0), dtype=x.dtype)

    # Trim trailing samples that don't fill a frame (glue, plain JAX).
    x = x[..., : n_frames * spf]

    b = 1
    for d in lead:
        b *= d
    rows = b * n_frames

    # Tiny inputs: pallas_call launch + pipeline prologue dwarfs the work.
    if rows * spf < _MIN_PALLAS_ELEMENTS:
        xr = x.reshape(*lead, n_frames, spf)
        return jnp.var(xr.astype(jnp.float32), axis=-1, ddof=1).astype(x.dtype)

    # Flatten to a 2-D row-reduction problem: (rows, spf).
    xf = x.reshape(rows, spf)

    # Row-tile sizing: large, aligned tiles (the kernel is HBM-bandwidth bound),
    # bounded so double-buffered VMEM stays ~1.3 MiB on all generations.
    if rows >= _TM_TARGET:
        tm = _TM_TARGET                      # multiple of 8 and 128 -> unmasked stores
    elif rows >= 128:
        tm = _round_up(rows, 128)            # single lane-dense block
    else:
        tm = _round_up(rows, 8)              # tiny single block (masked store is negligible)
    n_tiles = (rows + tm - 1) // tm
    padded_rows = n_tiles * tm
    if padded_rows != rows:
        xf = jnp.pad(xf, ((0, padded_rows - rows), (0, 0)))

    itemsize = jnp.dtype(x.dtype).itemsize
    cost = pl.CostEstimate(
        flops=3 * padded_rows * spf,
        transcendentals=0,
        bytes_accessed=padded_rows * spf * itemsize + padded_rows * itemsize,
    )

    out = pl.pallas_call(
        _energy_kernel,
        out_shape=jax.ShapeDtypeStruct((n_tiles, tm), x.dtype),
        grid_spec=pltpu.PrefetchScalarGridSpec(
            num_scalar_prefetch=0,
            grid=(n_tiles,),
            in_specs=[pl.BlockSpec((tm, spf), lambda i: (i, 0))],
            out_specs=pl.BlockSpec((1, tm), lambda i: (i, 0)),
        ),
        compiler_params=pltpu.CompilerParams(
            dimension_semantics=("parallel",)),
        cost_estimate=cost,
    )(xf)

    # Drop padded rows, restore the original leading dims.
    return out.reshape(-1)[:rows].reshape(*lead, n_frames)


def _reference(x: jnp.ndarray, spf: int) -> jnp.ndarray:
    """Pure-JAX reference mirroring the PyTorch module."""
    n_frames = x.shape[-1] // spf
    x = x[..., : n_frames * spf]
    xr = x.reshape(*x.shape[:-1], n_frames, spf)
    return jnp.var(xr, axis=-1, ddof=1)


if __name__ == "__main__":
    key = jax.random.PRNGKey(0)
    k1, k2, k3 = jax.random.split(key, 3)
    SPF = 320  # default module params: 16 kHz, 20 ms

    checks = []

    # (a) Multi-leading-dim clip, single lane-dense tile:
    #     (2, 3, 12815) -> 40 frames/row -> 240 rows -> tm = 256, grid = (1,).
    x1 = jax.random.normal(k1, (2, 3, 12815), dtype=jnp.float32)
    o1 = jax.block_until_ready(energy_estimator(x1))
    checks.append((o1, _reference(x1, SPF), (2, 3, 40)))

    # (b) Larger clip with a DC offset, multi-tile path:
    #     (4, 130010) -> 406 frames/row -> 1624 rows -> 4 tiles of 512 ("parallel").
    x2 = jax.random.normal(k2, (4, 130_010), dtype=jnp.float32) + 5.0
    o2 = jax.block_until_ready(energy_estimator(x2))
    checks.append((o2, _reference(x2, SPF), (4, 406)))

    # (c) Tiny input -> pure-JAX fallback path.
    x3 = jax.random.normal(k3, (2, 700), dtype=jnp.float32)
    o3 = jax.block_until_ready(energy_estimator(x3))
    checks.append((o3, _reference(x3, SPF), (2, 2)))

    # (d) Shorter than one frame -> empty frame axis.
    o4 = energy_estimator(jnp.ones((2, 100), dtype=jnp.float32))
    assert o4.shape == (2, 0), o4.shape

    for out, ref, shape in checks:
        assert out.shape == ref.shape == shape, (out.shape, ref.shape, shape)
        err = float(jnp.max(jnp.abs(out - ref))) if out.size else 0.0
        assert jnp.allclose(out, ref, rtol=5e-4, atol=1e-5), f"mismatch vs reference: {err}"

    print("KERNEL_OK")
</pallas_src>

<mosaic_0001>
module attributes {stable_mosaic.version = 11 : i64} {
  func.func @_energy_kernel(%arg0: i32, %arg1: memref<256x320xf32, #tpu.memory_space<vmem>>, %arg2: memref<1x256xf32, #tpu.memory_space<vmem>>) attributes {dimension_semantics = [#tpu.dimension_semantics<parallel>], iteration_bounds = array<i64: 1>, scalar_prefetch = 0 : i64, scratch_operands = 0 : i64, tpu.core_type = #tpu.core_type<tc>, window_params = [{transform_indices = @transform_0, window_bounds = array<i64: 256, 320>}, {transform_indices = @transform_1, window_bounds = array<i64: 1, 256>}]} {
    %c0 = arith.constant 0 : index
    %c0_0 = arith.constant 0 : index
    %0 = vector.load %arg1[%c0, %c0_0] : memref<256x320xf32, #tpu.memory_space<vmem>>, vector<256x320xf32>
    %1 = vector.extract_strided_slice %0 {offsets = [0, 0], sizes = [256, 1], strides = [1, 1]} : vector<256x320xf32> to vector<256x1xf32>
    %2 = vector.broadcast %1 : vector<256x1xf32> to vector<256x320xf32>
    %3 = arith.subf %0, %2 : vector<256x320xf32>
    %cst = arith.constant dense<0.000000e+00> : vector<256xf32>
    %4 = vector.multi_reduction <add>, %3, %cst [1] : vector<256x320xf32> to vector<256xf32>
    %5 = arith.mulf %3, %3 : vector<256x320xf32>
    %cst_1 = arith.constant dense<0.000000e+00> : vector<256xf32>
    %6 = vector.multi_reduction <add>, %5, %cst_1 [1] : vector<256x320xf32> to vector<256xf32>
    %7 = arith.mulf %4, %4 : vector<256xf32>
    %cst_2 = arith.constant 3.125000e-03 : f32
    %8 = vector.broadcast %cst_2 : f32 to vector<256xf32>
    %9 = arith.mulf %7, %8 : vector<256xf32>
    %10 = arith.subf %6, %9 : vector<256xf32>
    %cst_3 = arith.constant 0.00313479616 : f32
    %11 = vector.broadcast %cst_3 : f32 to vector<256xf32>
    %12 = arith.mulf %10, %11 : vector<256xf32>
    %13 = vector.shape_cast %12 : vector<256xf32> to vector<1x256xf32>
    %c0_4 = arith.constant 0 : index
    %c0_5 = arith.constant 0 : index
    %14 = vector.load %arg2[%c0_4, %c0_5] : memref<1x256xf32, #tpu.memory_space<vmem>>, vector<1x256xf32>
    tpu.vector_store %arg2[%c0_4, %c0_5], %13 {strides = array<i32>} : memref<1x256xf32, #tpu.memory_space<vmem>>, vector<1x256xf32>,
    return
  }
  func.func @transform_0(%arg0: i32) -> (i32, i32) {
    %c0_i32 = arith.constant 0 : i32
    %c0_i32_0 = arith.constant 0 : i32
    return %arg0, %c0_i32 : i32, i32
  }
  func.func @transform_1(%arg0: i32) -> (i32, i32) {
    %c0_i32 = arith.constant 0 : i32
    %c0_i32_0 = arith.constant 0 : i32
    return %arg0, %c0_i32 : i32, i32
  }
}

</mosaic_0001>

<llo_original>
// kernel: tpu_custom_call.1
$region0: #{tpu_custom_call.1}
  #allocation0 [shape = 'u32[]', space=smem, size = 0x4, offset = 0x4, fixed_abs, tag = 'smem constant byte address 0x4 - core index']
  #allocation1 [shape = 'u32[144,128]{1,0:T(1,128)}', space=vmem, size = 0x12000, scoped, tag = 'internal scratch']
  %s0 = inlined_call_operand.vmem [shape: f32[256,320], index: 0, kind: input, shape index: {}]
  %s1 = inlined_call_operand.hbm [shape: f32[1,256], index: 1, kind: output, shape index: {}]
  %s2 = sld [smem:[#allocation0]]
  $region14: #{tpu_custom_call.1} parent=0
    _
  %s4 = ssub.s32 1, %s2
  %s5 = scalar_select 0, %s4, %s2
  $region1: #{tpu_custom_call.1} parent=0
    #allocation2 [shape = 'u8[1024]{0}', space=vmem, size = 0x400, scoped, tag = 'output window, operand 0, single buffered']
    #allocation3 [shape = 's32[1]{0}', space=sflag, size = 0x4, scoped, tag = 'scoped memory for tpu_custom_call.1']
    %6 = vsyncpa [#allocation3], 0
    // Predicated region
    $region2: #{tpu_custom_call.1} parent=1 // pred_check
      _
    $region3: #{tpu_custom_call.1} parent=1 // pred_check_branch
      %8 = sbr.rel (0) target = $region5
    $region4: #{tpu_custom_call.1} parent=1 // pred_region
      _
    $region5: #{tpu_custom_call.1} parent=1 // pred_fallthru
      _
    %v9 = vld [vmem:[%s0] sm:$0xff]
    %v10 = vld [vmem:[%s0 + $0x8] sm:$0xff]
    %v11 = vld [vmem:[%s0 + $0x10] sm:$0xff]
    %v12 = vld [vmem:[%s0 + $0x18] sm:$0xff]
    %v13 = vld [vmem:[%s0 + $0x20] sm:$0xff]
    %v14 = vld [vmem:[%s0 + $0x28] sm:$0xff]
    %v15 = vld [vmem:[%s0 + $0x30] sm:$0xff]
    %v16 = vld [vmem:[%s0 + $0x38] sm:$0xff]
    %v17 = vld [vmem:[%s0 + $0x40] sm:$0xff]
    %v18 = vld [vmem:[%s0 + $0x48] sm:$0xff]
    %v19 = vld [vmem:[%s0 + $0x50] sm:$0xff]
    %v20 = vld [vmem:[%s0 + $0x58] sm:$0xff]
    %v21 = vld [vmem:[%s0 + $0x60] sm:$0xff]
    %v22 = vld [vmem:[%s0 + $0x68] sm:$0xff]
    %v23 = vld [vmem:[%s0 + $0x70] sm:$0xff]
    %v24 = vld [vmem:[%s0 + $0x78] sm:$0xff]
    %v25 = vld [vmem:[%s0 + $0x80] sm:$0xff]
    %v26 = vld [vmem:[%s0 + $0x88] sm:$0xff]
    %v27 = vld [vmem:[%s0 + $0x90] sm:$0xff]
    %v28 = vld [vmem:[%s0 + $0x98] sm:$0xff]
    %v29 = vld [vmem:[%s0 + $0xa0] sm:$0xff]
    %v30 = vld [vmem:[%s0 + $0xa8] sm:$0xff]
    %v31 = vld [vmem:[%s0 + $0xb0] sm:$0xff]
    %v32 = vld [vmem:[%s0 + $0xb8] sm:$0xff]
    %v33 = vld [vmem:[%s0 + $0xc0] sm:$0xff]
    %v34 = vld [vmem:[%s0 + $0xc8] sm:$0xff]
    %v35 = vld [vmem:[%s0 + $0xd0] sm:$0xff]
    %v36 = vld [vmem:[%s0 + $0xd8] sm:$0xff]
    %v37 = vld [vmem:[%s0 + $0xe0] sm:$0xff]
    %v38 = vld [vmem:[%s0 + $0xe8] sm:$0xff]
    %v39 = vld [vmem:[%s0 + $0xf0] sm:$0xff]
    %v40 = vld [vmem:[%s0 + $0xf8] sm:$0xff]
    %v41 = vld [vmem:[%s0 + $0x100] sm:$0xff]
    %v42 = vld [vmem:[%s0 + $0x108] sm:$0xff]
    %v43 = vld [vmem:[%s0 + $0x110] sm:$0xff]
    %v44 = vld [vmem:[%s0 + $0x118] sm:$0xff]
    %v45 = vld [vmem:[%s0 + $0x120] sm:$0xff]
    %v46 = vld [vmem:[%s0 + $0x128] sm:$0xff]
    %v47 = vld [vmem:[%s0 + $0x130] sm:$0xff]
    %v48 = vld [vmem:[%s0 + $0x138] sm:$0xff]
    %v49 = vld [vmem:[%s0 + $0x140] sm:$0xff]
    %v50 = vld [vmem:[%s0 + $0x148] sm:$0xff]
    %v51 = vld [vmem:[%s0 + $0x150] sm:$0xff]
    %v52 = vld [vmem:[%s0 + $0x158] sm:$0xff]
    %v53 = vld [vmem:[%s0 + $0x160] sm:$0xff]
    %v54 = vld [vmem:[%s0 + $0x168] sm:$0xff]
    %v55 = vld [vmem:[%s0 + $0x170] sm:$0xff]
    %v56 = vld [vmem:[%s0 + $0x178] sm:$0xff]
    %v57 = vld [vmem:[%s0 + $0x180] sm:$0xff]
    %v58 = vld [vmem:[%s0 + $0x188] sm:$0xff]
    %v59 = vld [vmem:[%s0 + $0x190] sm:$0xff]
    %v60 = vld [vmem:[%s0 + $0x198] sm:$0xff]
    %v61 = vld [vmem:[%s0 + $0x1a0] sm:$0xff]
    %v62 = vld [vmem:[%s0 + $0x1a8] sm:$0xff]
    %v63 = vld [vmem:[%s0 + $0x1b0] sm:$0xff]
    %v64 = vld [vmem:[%s0 + $0x1b8] sm:$0xff]
    %v65 = vld [vmem:[%s0 + $0x1c0] sm:$0xff]
    %v66 = vld [vmem:[%s0 + $0x1c8] sm:$0xff]
    %v67 = vld [vmem:[%s0 + $0x1d0] sm:$0xff]
    %v68 = vld [vmem:[%s0 + $0x1d8] sm:$0xff]
    %v69 = vld [vmem:[%s0 + $0x1e0] sm:$0xff]
    %v70 = vld [vmem:[%s0 + $0x1e8] sm:$0xff]
    %v71 = vld [vmem:[%s0 + $0x1f0] sm:$0xff]
    %v72 = vld [vmem:[%s0 + $0x1f8] sm:$0xff]
    %v73 = vld [vmem:[%s0 + $0x200] sm:$0xff]
    %v74 = vld [vmem:[%s0 + $0x208] sm:$0xff]
    %v75 = vld [vmem:[%s0 + $0x210] sm:$0xff]
    %v76 = vld [vmem:[%s0 + $0x218] sm:$0xff]
    %v77 = vld [vmem:[%s0 + $0x220] sm:$0xff]
    %v78 = vld [vmem:[%s0 + $0x228] sm:$0xff]
    %v79 = vld [vmem:[%s0 + $0x230] sm:$0xff]
    %v80 = vld [vmem:[%s0 + $0x238] sm:$0xff]
    %v81 = vld [vmem:[%s0 + $0x240] sm:$0xff]
    %v82 = vld [vmem:[%s0 + $0x248] sm:$0xff]
    %v83 = vld [vmem:[%s0 + $0x250] sm:$0xff]
    %v84 = vld [vmem:[%s0 + $0x258] sm:$0xff]
    %v85 = vld [vmem:[%s0 + $0x260] sm:$0xff]
    %v86 = vld [vmem:[%s0 + $0x268] sm:$0xff]
    %v87 = vld [vmem:[%s0 + $0x270] sm:$0xff]
    %v88 = vld [vmem:[%s0 + $0x278] sm:$0xff]
    %v89 = vld [vmem:[%s0 + $0x280] sm:$0xff]
    %v90 = vld [vmem:[%s0 + $0x288] sm:$0xff]
    %v91 = vld [vmem:[%s0 + $0x290] sm:$0xff]
    %v92 = vld [vmem:[%s0 + $0x298] sm:$0xff]
    %v93 = vld [vmem:[%s0 + $0x2a0] sm:$0xff]
    %v94 = vld [vmem:[%s0 + $0x2a8] sm:$0xff]
    %v95 = vld [vmem:[%s0 + $0x2b0] sm:$0xff]
    %v96 = vld [vmem:[%s0 + $0x2b8] sm:$0xff]
    %v97 = vld [vmem:[%s0 + $0x2c0] sm:$0xff]
    %v98 = vld [vmem:[%s0 + $0x2c8] sm:$0xff]
    %v99 = vld [vmem:[%s0 + $0x2d0] sm:$0xff]
    %v100 = vld [vmem:[%s0 + $0x2d8] sm:$0xff]
    %v101 = vld [vmem:[%s0 + $0x2e0] sm:$0xff]
    %v102 = vld [vmem:[%s0 + $0x2e8] sm:$0xff]
    %v103 = vld [vmem:[%s0 + $0x2f0] sm:$0xff]
    %v104 = vld [vmem:[%s0 + $0x2f8] sm:$0xff]
    %106 = vset.pattern.permute.xlu0 0
    %107 = vperm.xlu0 %106, %v9
    %v108 = vpop.permute.xlu0 %107
    %111 = vset.pattern.permute.xlu0 0
    %112 = vperm.xlu0 %111, %v12
    %v113 = vpop.permute.xlu0 %112
    %116 = vset.pattern.permute.xlu0 0
    %117 = vperm.xlu0 %116, %v15
    %v118 = vpop.permute.xlu0 %117
    %121 = vset.pattern.permute.xlu0 0
    %122 = vperm.xlu0 %121, %v18
    %v123 = vpop.permute.xlu0 %122
    %126 = vset.pattern.permute.xlu0 0
    %127 = vperm.xlu0 %126, %v21
    %v128 = vpop.permute.xlu0 %127
    %131 = vset.pattern.permute.xlu0 0
    %132 = vperm.xlu0 %131, %v24
    %v133 = vpop.permute.xlu0 %132
    %136 = vset.pattern.permute.xlu0 0
    %137 = vperm.xlu0 %136, %v27
    %v138 = vpop.permute.xlu0 %137
    %141 = vset.pattern.permute.xlu0 0
    %142 = vperm.xlu0 %141, %v30
    %v143 = vpop.permute.xlu0 %142
    %146 = vset.pattern.permute.xlu0 0
    %147 = vperm.xlu0 %146, %v33
    %v148 = vpop.permute.xlu0 %147
    %151 = vset.pattern.permute.xlu0 0
    %152 = vperm.xlu0 %151, %v36
    %v153 = vpop.permute.xlu0 %152
    %156 = vset.pattern.permute.xlu0 0
    %157 = vperm.xlu0 %156, %v39
    %v158 = vpop.permute.xlu0 %157
    %161 = vset.pattern.permute.xlu0 0
    %162 = vperm.xlu0 %161, %v42
    %v163 = vpop.permute.xlu0 %162
    %166 = vset.pattern.permute.xlu0 0
    %167 = vperm.xlu0 %166, %v45
    %v168 = vpop.permute.xlu0 %167
    %171 = vset.pattern.permute.xlu0 0
    %172 = vperm.xlu0 %171, %v48
    %v173 = vpop.permute.xlu0 %172
    %176 = vset.pattern.permute.xlu0 0
    %177 = vperm.xlu0 %176, %v51
    %v178 = vpop.permute.xlu0 %177
    %181 = vset.pattern.permute.xlu0 0
    %182 = vperm.xlu0 %181, %v54
    %v183 = vpop.permute.xlu0 %182
    %186 = vset.pattern.permute.xlu0 0
    %187 = vperm.xlu0 %186, %v57
    %v188 = vpop.permute.xlu0 %187
    %191 = vset.pattern.permute.xlu0 0
    %192 = vperm.xlu0 %191, %v60
    %v193 = vpop.permute.xlu0 %192
    %196 = vset.pattern.permute.xlu0 0
    %197 = vperm.xlu0 %196, %v63
    %v198 = vpop.permute.xlu0 %197
    %201 = vset.pattern.permute.xlu0 0
    %202 = vperm.xlu0 %201, %v66
    %v203 = vpop.permute.xlu0 %202
    %206 = vset.pattern.permute.xlu0 0
    %207 = vperm.xlu0 %206, %v69
    %v208 = vpop.permute.xlu0 %207
    %211 = vset.pattern.permute.xlu0 0
    %212 = vperm.xlu0 %211, %v72
    %v213 = vpop.permute.xlu0 %212
    %216 = vset.pattern.permute.xlu0 0
    %217 = vperm.xlu0 %216, %v75
    %v218 = vpop.permute.xlu0 %217
    %221 = vset.pattern.permute.xlu0 0
    %222 = vperm.xlu0 %221, %v78
    %v223 = vpop.permute.xlu0 %222
    %226 = vset.pattern.permute.xlu0 0
    %227 = vperm.xlu0 %226, %v81
    %v228 = vpop.permute.xlu0 %227
    %231 = vset.pattern.permute.xlu0 0
    %232 = vperm.xlu0 %231, %v84
    %v233 = vpop.permute.xlu0 %232
    %236 = vset.pattern.permute.xlu0 0
    %237 = vperm.xlu0 %236, %v87
    %v238 = vpop.permute.xlu0 %237
    %241 = vset.pattern.permute.xlu0 0
    %242 = vperm.xlu0 %241, %v90
    %v243 = vpop.permute.xlu0 %242
    %246 = vset.pattern.permute.xlu0 0
    %247 = vperm.xlu0 %246, %v93
    %v248 = vpop.permute.xlu0 %247
    %251 = vset.pattern.permute.xlu0 0
    %252 = vperm.xlu0 %251, %v96
    %v253 = vpop.permute.xlu0 %252
    %256 = vset.pattern.permute.xlu0 0
    %257 = vperm.xlu0 %256, %v99
    %v258 = vpop.permute.xlu0 %257
    %261 = vset.pattern.permute.xlu0 0
    %262 = vperm.xlu0 %261, %v102
    %v263 = vpop.permute.xlu0 %262
    %v265 = vsub.f32 %v9, %v108
    %v266 = vsub.f32 %v10, %v108
    %v267 = vsub.f32 %v11, %v108
    %v268 = vsub.f32 %v12, %v113
    %v269 = vsub.f32 %v13, %v113
    %v270 = vsub.f32 %v14, %v113
    %v271 = vsub.f32 %v15, %v118
    %v272 = vsub.f32 %v16, %v118
    %v273 = vsub.f32 %v17, %v118
    %v274 = vsub.f32 %v18, %v123
    %v275 = vsub.f32 %v19, %v123
    %v276 = vsub.f32 %v20, %v123
    %v277 = vsub.f32 %v21, %v128
    %v278 = vsub.f32 %v22, %v128
    %v279 = vsub.f32 %v23, %v128
    %v280 = vsub.f32 %v24, %v133
    %v281 = vsub.f32 %v25, %v133
    %v282 = vsub.f32 %v26, %v133
    %v283 = vsub.f32 %v27, %v138
    %v284 = vsub.f32 %v28, %v138
    %v285 = vsub.f32 %v29, %v138
    %v286 = vsub.f32 %v30, %v143
    %v287 = vsub.f32 %v31, %v143
    %v288 = vsub.f32 %v32, %v143
    %v289 = vsub.f32 %v33, %v148
    %v290 = vsub.f32 %v34, %v148
    %v291 = vsub.f32 %v35, %v148
    %v292 = vsub.f32 %v36, %v153
    %v293 = vsub.f32 %v37, %v153
    %v294 = vsub.f32 %v38, %v153
    %v295 = vsub.f32 %v39, %v158
    %v296 = vsub.f32 %v40, %v158
    %v297 = vsub.f32 %v41, %v158
    %v298 = vsub.f32 %v42, %v163
    %v299 = vsub.f32 %v43, %v163
    %v300 = vsub.f32 %v44, %v163
    %v301 = vsub.f32 %v45, %v168
    %v302 = vsub.f32 %v46, %v168
    %v303 = vsub.f32 %v47, %v168
    %v304 = vsub.f32 %v48, %v173
    %v305 = vsub.f32 %v49, %v173
    %v306 = vsub.f32 %v50, %v173
    %v307 = vsub.f32 %v51, %v178
    %v308 = vsub.f32 %v52, %v178
    %v309 = vsub.f32 %v53, %v178
    %v310 = vsub.f32 %v54, %v183
    %v311 = vsub.f32 %v55, %v183
    %v312 = vsub.f32 %v56, %v183
    %v313 = vsub.f32 %v57, %v188
    %v314 = vsub.f32 %v58, %v188
    %v315 = vsub.f32 %v59, %v188
    %v316 = vsub.f32 %v60, %v193
    %v317 = vsub.f32 %v61, %v193
    %v318 = vsub.f32 %v62, %v193
    %v319 = vsub.f32 %v63, %v198
    %v320 = vsub.f32 %v64, %v198
    %v321 = vsub.f32 %v65, %v198
    %v322 = vsub.f32 %v66, %v203
    %v323 = vsub.f32 %v67, %v203
    %v324 = vsub.f32 %v68, %v203
    %v325 = vsub.f32 %v69, %v208
    %v326 = vsub.f32 %v70, %v208
    %v327 = vsub.f32 %v71, %v208
    %v328 = vsub.f32 %v72, %v213
    %v329 = vsub.f32 %v73, %v213
    %v330 = vsub.f32 %v74, %v213
    %v331 = vsub.f32 %v75, %v218
    %v332 = vsub.f32 %v76, %v218
    %v333 = vsub.f32 %v77, %v218
    %v334 = vsub.f32 %v78, %v223
    %v335 = vsub.f32 %v79, %v223
    %v336 = vsub.f32 %v80, %v223
    %v337 = vsub.f32 %v81, %v228
    %v338 = vsub.f32 %v82, %v228
    %v339 = vsub.f32 %v83, %v228
    %v340 = vsub.f32 %v84, %v233
    %v341 = vsub.f32 %v85, %v233
    %v342 = vsub.f32 %v86, %v233
    %v343 = vsub.f32 %v87, %v238
    %v344 = vsub.f32 %v88, %v238
    %v345 = vsub.f32 %v89, %v238
    %v346 = vsub.f32 %v90, %v243
    %v347 = vsub.f32 %v91, %v243
    %v348 = vsub.f32 %v92, %v243
    %v349 = vsub.f32 %v93, %v248
    %v350 = vsub.f32 %v94, %v248
    %v351 = vsub.f32 %v95, %v248
    %v352 = vsub.f32 %v96, %v253
    %v353 = vsub.f32 %v97, %v253
    %v354 = vsub.f32 %v98, %v253
    %v355 = vsub.f32 %v99, %v258
    %v356 = vsub.f32 %v100, %v258
    %v357 = vsub.f32 %v101, %v258
    %v358 = vsub.f32 %v102, %v263
    %v359 = vsub.f32 %v103, %v263
    %v360 = vsub.f32 %v104, %v263
    %v361 = vadd.f32 %v265, %v266
    %vm362 = vcmask 523264
    %v363 = vsel %vm362, %v267, 0.0
    %v364 = vadd.f32 %v361, %v363
    %365 = vadd.xlane.f32.xlu0 %v364
    %v366 = vpop.xlane.xlu0 %365
    %v367 = vadd.f32 %v268, %v269
    %v368 = vsel %vm362, %v270, 0.0
    %v369 = vadd.f32 %v367, %v368
    %370 = vadd.xlane.f32.xlu0 %v369
    %v371 = vpop.xlane.xlu0 %370
    %v372 = vadd.f32 %v271, %v272
    %v373 = vsel %vm362, %v273, 0.0
    %v374 = vadd.f32 %v372, %v373
    %375 = vadd.xlane.f32.xlu0 %v374
    %v376 = vpop.xlane.xlu0 %375
    %v377 = vadd.f32 %v274, %v275
    %v378 = vsel %vm362, %v276, 0.0
    %v379 = vadd.f32 %v377, %v378
    %380 = vadd.xlane.f32.xlu0 %v379
    %v381 = vpop.xlane.xlu0 %380
    %v382 = vadd.f32 %v277, %v278
    %v383 = vsel %vm362, %v279, 0.0
    %v384 = vadd.f32 %v382, %v383
    %385 = vadd.xlane.f32.xlu0 %v384
    %v386 = vpop.xlane.xlu0 %385
    %v387 = vadd.f32 %v280, %v281
    %v388 = vsel %vm362, %v282, 0.0
    %v389 = vadd.f32 %v387, %v388
    %390 = vadd.xlane.f32.xlu0 %v389
    %v391 = vpop.xlane.xlu0 %390
    %v392 = vadd.f32 %v283, %v284
    %v393 = vsel %vm362, %v285, 0.0
    %v394 = vadd.f32 %v392, %v393
    %395 = vadd.xlane.f32.xlu0 %v394
    %v396 = vpop.xlane.xlu0 %395
    %v397 = vadd.f32 %v286, %v287
    %v398 = vsel %vm362, %v288, 0.0
    %v399 = vadd.f32 %v397, %v398
    %400 = vadd.xlane.f32.xlu0 %v399
    %v401 = vpop.xlane.xlu0 %400
    %v402 = vadd.f32 %v289, %v290
    %v403 = vsel %vm362, %v291, 0.0
    %v404 = vadd.f32 %v402, %v403
    %405 = vadd.xlane.f32.xlu0 %v404
    %v406 = vpop.xlane.xlu0 %405
    %v407 = vadd.f32 %v292, %v293
    %v408 = vsel %vm362, %v294, 0.0
    %v409 = vadd.f32 %v407, %v408
    %410 = vadd.xlane.f32.xlu0 %v409
    %v411 = vpop.xlane.xlu0 %410
    %v412 = vadd.f32 %v295, %v296
    %v413 = vsel %vm362, %v297, 0.0
    %v414 = vadd.f32 %v412, %v413
    %415 = vadd.xlane.f32.xlu0 %v414
    %v416 = vpop.xlane.xlu0 %415
    %v417 = vadd.f32 %v298, %v299
    %v418 = vsel %vm362, %v300, 0.0
    %v419 = vadd.f32 %v417, %v418
    %420 = vadd.xlane.f32.xlu0 %v419
    %v421 = vpop.xlane.xlu0 %420
    %v422 = vadd.f32 %v301, %v302
    %v423 = vsel %vm362, %v303, 0.0
    %v424 = vadd.f32 %v422, %v423
    %425 = vadd.xlane.f32.xlu0 %v424
    %v426 = vpop.xlane.xlu0 %425
    %v427 = vadd.f32 %v304, %v305
    %v428 = vsel %vm362, %v306, 0.0
    %v429 = vadd.f32 %v427, %v428
    %430 = vadd.xlane.f32.xlu0 %v429
    %v431 = vpop.xlane.xlu0 %430
    %v432 = vadd.f32 %v307, %v308
    %v433 = vsel %vm362, %v309, 0.0
    %v434 = vadd.f32 %v432, %v433
    %435 = vadd.xlane.f32.xlu0 %v434
    %v436 = vpop.xlane.xlu0 %435
    %v437 = vadd.f32 %v310, %v311
    %v438 = vsel %vm362, %v312, 0.0
    %v439 = vadd.f32 %v437, %v438
    %440 = vadd.xlane.f32.xlu0 %v439
    %v441 = vpop.xlane.xlu0 %440
    %v442 = vadd.f32 %v313, %v314
    %v443 = vsel %vm362, %v315, 0.0
    %v444 = vadd.f32 %v442, %v443
    %445 = vadd.xlane.f32.xlu0 %v444
    %v446 = vpop.xlane.xlu0 %445
    %v447 = vadd.f32 %v316, %v317
    %v448 = vsel %vm362, %v318, 0.0
    %v449 = vadd.f32 %v447, %v448
    %450 = vadd.xlane.f32.xlu0 %v449
    %v451 = vpop.xlane.xlu0 %450
    %v452 = vadd.f32 %v319, %v320
    %v453 = vsel %vm362, %v321, 0.0
    %v454 = vadd.f32 %v452, %v453
    %455 = vadd.xlane.f32.xlu0 %v454
    %v456 = vpop.xlane.xlu0 %455
    %v457 = vadd.f32 %v322, %v323
    %v458 = vsel %vm362, %v324, 0.0
    %v459 = vadd.f32 %v457, %v458
    %460 = vadd.xlane.f32.xlu0 %v459
    %v461 = vpop.xlane.xlu0 %460
    %v462 = vadd.f32 %v325, %v326
    %v463 = vsel %vm362, %v327, 0.0
    %v464 = vadd.f32 %v462, %v463
    %465 = vadd.xlane.f32.xlu0 %v464
    %v466 = vpop.xlane.xlu0 %465
    %v467 = vadd.f32 %v328, %v329
    %v468 = vsel %vm362, %v330, 0.0
    %v469 = vadd.f32 %v467, %v468
    %470 = vadd.xlane.f32.xlu0 %v469
    %v471 = vpop.xlane.xlu0 %470
    %v472 = vadd.f32 %v331, %v332
    %v473 = vsel %vm362, %v333, 0.0
    %v474 = vadd.f32 %v472, %v473
    %475 = vadd.xlane.f32.xlu0 %v474
    %v476 = vpop.xlane.xlu0 %475
    %v477 = vadd.f32 %v334, %v335
    %v478 = vsel %vm362, %v336, 0.0
    %v479 = vadd.f32 %v477, %v478
    %480 = vadd.xlane.f32.xlu0 %v479
    %v481 = vpop.xlane.xlu0 %480
    %v482 = vadd.f32 %v337, %v338
    %v483 = vsel %vm362, %v339, 0.0
    %v484 = vadd.f32 %v482, %v483
    %485 = vadd.xlane.f32.xlu0 %v484
    %v486 = vpop.xlane.xlu0 %485
    %v487 = vadd.f32 %v340, %v341
    %v488 = vsel %vm362, %v342, 0.0
    %v489 = vadd.f32 %v487, %v488
    %490 = vadd.xlane.f32.xlu0 %v489
    %v491 = vpop.xlane.xlu0 %490
    %v492 = vadd.f32 %v343, %v344
    %v493 = vsel %vm362, %v345, 0.0
    %v494 = vadd.f32 %v492, %v493
    %495 = vadd.xlane.f32.xlu0 %v494
    %v496 = vpop.xlane.xlu0 %495
    %v497 = vadd.f32 %v346, %v347
    %v498 = vsel %vm362, %v348, 0.0
    %v499 = vadd.f32 %v497, %v498
    %500 = vadd.xlane.f32.xlu0 %v499
    %v501 = vpop.xlane.xlu0 %500
    %v502 = vadd.f32 %v349, %v350
    %v503 = vsel %vm362, %v351, 0.0
    %v504 = vadd.f32 %v502, %v503
    %505 = vadd.xlane.f32.xlu0 %v504
    %v506 = vpop.xlane.xlu0 %505
    %v507 = vadd.f32 %v352, %v353
    %v508 = vsel %vm362, %v354, 0.0
    %v509 = vadd.f32 %v507, %v508
    %510 = vadd.xlane.f32.xlu0 %v509
    %v511 = vpop.xlane.xlu0 %510
    %v512 = vadd.f32 %v355, %v356
    %v513 = vsel %vm362, %v357, 0.0
    %v514 = vadd.f32 %v512, %v513
    %515 = vadd.xlane.f32.xlu0 %v514
    %v516 = vpop.xlane.xlu0 %515
    %v517 = vadd.f32 %v358, %v359
    %v518 = vsel %vm362, %v360, 0.0
    %v519 = vadd.f32 %v517, %v518
    %520 = vadd.xlane.f32.xlu0 %v519
    %v521 = vpop.xlane.xlu0 %520
    %v522 = vmul.f32 %v265, %v265
    %v523 = vmul.f32 %v266, %v266
    %v524 = vmul.f32 %v267, %v267
    %v525 = vmul.f32 %v268, %v268
    %v526 = vmul.f32 %v269, %v269
    %v527 = vmul.f32 %v270, %v270
    %v528 = vmul.f32 %v271, %v271
    %v529 = vmul.f32 %v272, %v272
    %v530 = vmul.f32 %v273, %v273
    %v531 = vmul.f32 %v274, %v274
    %v532 = vmul.f32 %v275, %v275
    %v533 = vmul.f32 %v276, %v276
    %v534 = vmul.f32 %v277, %v277
    %v535 = vmul.f32 %v278, %v278
    %v536 = vmul.f32 %v279, %v279
    %v537 = vmul.f32 %v280, %v280
    %v538 = vmul.f32 %v281, %v281
    %v539 = vmul.f32 %v282, %v282
    %v540 = vmul.f32 %v283, %v283
    %v541 = vmul.f32 %v284, %v284
    %v542 = vmul.f32 %v285, %v285
    %v543 = vmul.f32 %v286, %v286
    %v544 = vmul.f32 %v287, %v287
    %v545 = vmul.f32 %v288, %v288
    %v546 = vmul.f32 %v289, %v289
    %v547 = vmul.f32 %v290, %v290
    %v548 = vmul.f32 %v291, %v291
    %v549 = vmul.f32 %v292, %v292
    %v550 = vmul.f32 %v293, %v293
    %v551 = vmul.f32 %v294, %v294
    %v552 = vmul.f32 %v295, %v295
    %v553 = vmul.f32 %v296, %v296
    %v554 = vmul.f32 %v297, %v297
    %v555 = vmul.f32 %v298, %v298
    %v556 = vmul.f32 %v299, %v299
    %v557 = vmul.f32 %v300, %v300
    %v558 = vmul.f32 %v301, %v301
    %v559 = vmul.f32 %v302, %v302
    %v560 = vmul.f32 %v303, %v303
    %v561 = vmul.f32 %v304, %v304
    %v562 = vmul.f32 %v305, %v305
    %v563 = vmul.f32 %v306, %v306
    %v564 = vmul.f32 %v307, %v307
    %v565 = vmul.f32 %v308, %v308
    %v566 = vmul.f32 %v309, %v309
    %v567 = vmul.f32 %v310, %v310
    %v568 = vmul.f32 %v311, %v311
    %v569 = vmul.f32 %v312, %v312
    %v570 = vmul.f32 %v313, %v313
    %v571 = vmul.f32 %v314, %v314
    %v572 = vmul.f32 %v315, %v315
    %v573 = vmul.f32 %v316, %v316
    %v574 = vmul.f32 %v317, %v317
    %v575 = vmul.f32 %v318, %v318
    %v576 = vmul.f32 %v319, %v319
    %v577 = vmul.f32 %v320, %v320
    %v578 = vmul.f32 %v321, %v321
    %v579 = vmul.f32 %v322, %v322
    %v580 = vmul.f32 %v323, %v323
    %v581 = vmul.f32 %v324, %v324
    %v582 = vmul.f32 %v325, %v325
    %v583 = vmul.f32 %v326, %v326
    %v584 = vmul.f32 %v327, %v327
    %v585 = vmul.f32 %v328, %v328
    %v586 = vmul.f32 %v329, %v329
    %v587 = vmul.f32 %v330, %v330
    %v588 = vmul.f32 %v331, %v331
    %v589 = vmul.f32 %v332, %v332
    %v590 = vmul.f32 %v333, %v333
    %v591 = vmul.f32 %v334, %v334
    %v592 = vmul.f32 %v335, %v335
    %v593 = vmul.f32 %v336, %v336
    %v594 = vmul.f32 %v337, %v337
    %v595 = vmul.f32 %v338, %v338
    %v596 = vmul.f32 %v339, %v339
    %v597 = vmul.f32 %v340, %v340
    %v598 = vmul.f32 %v341, %v341
    %v599 = vmul.f32 %v342, %v342
    %v600 = vmul.f32 %v343, %v343
    %v601 = vmul.f32 %v344, %v344
    %v602 = vmul.f32 %v345, %v345
    %v603 = vmul.f32 %v346, %v346
    %v604 = vmul.f32 %v347, %v347
    %v605 = vmul.f32 %v348, %v348
    %v606 = vmul.f32 %v349, %v349
    %v607 = vmul.f32 %v350, %v350
    %v608 = vmul.f32 %v351, %v351
    %v609 = vmul.f32 %v352, %v352
    %v610 = vmul.f32 %v353, %v353
    %v611 = vmul.f32 %v354, %v354
    %v612 = vmul.f32 %v355, %v355
    %v613 = vmul.f32 %v356, %v356
    %v614 = vmul.f32 %v357, %v357
    %v615 = vmul.f32 %v358, %v358
    %v616 = vmul.f32 %v359, %v359
    %v617 = vmul.f32 %v360, %v360
    %v618 = vadd.f32 %v522, %v523
    %v619 = vsel %vm362, %v524, 0.0
    %v620 = vadd.f32 %v618, %v619
    %621 = vadd.xlane.f32.xlu0 %v620
    %v622 = vpop.xlane.xlu0 %621
    %v623 = vadd.f32 %v525, %v526
    %v624 = vsel %vm362, %v527, 0.0
    %v625 = vadd.f32 %v623, %v624
    %626 = vadd.xlane.f32.xlu0 %v625
    %v627 = vpop.xlane.xlu0 %626
    %v628 = vadd.f32 %v528, %v529
    %v629 = vsel %vm362, %v530, 0.0
    %v630 = vadd.f32 %v628, %v629
    %631 = vadd.xlane.f32.xlu0 %v630
    %v632 = vpop.xlane.xlu0 %631
    %v633 = vadd.f32 %v531, %v532
    %v634 = vsel %vm362, %v533, 0.0
    %v635 = vadd.f32 %v633, %v634
    %636 = vadd.xlane.f32.xlu0 %v635
    %v637 = vpop.xlane.xlu0 %636
    %v638 = vadd.f32 %v534, %v535
    %v639 = vsel %vm362, %v536, 0.0
    %v640 = vadd.f32 %v638, %v639
    %641 = vadd.xlane.f32.xlu0 %v640
    %v642 = vpop.xlane.xlu0 %641
    %v643 = vadd.f32 %v537, %v538
    %v644 = vsel %vm362, %v539, 0.0
    %v645 = vadd.f32 %v643, %v644
    %646 = vadd.xlane.f32.xlu0 %v645
    %v647 = vpop.xlane.xlu0 %646
    %v648 = vadd.f32 %v540, %v541
    %v649 = vsel %vm362, %v542, 0.0
    %v650 = vadd.f32 %v648, %v649
    %651 = vadd.xlane.f32.xlu0 %v650
    %v652 = vpop.xlane.xlu0 %651
    %v653 = vadd.f32 %v543, %v544
    %v654 = vsel %vm362, %v545, 0.0
    %v655 = vadd.f32 %v653, %v654
    %656 = vadd.xlane.f32.xlu0 %v655
    %v657 = vpop.xlane.xlu0 %656
    %v658 = vadd.f32 %v546, %v547
    %v659 = vsel %vm362, %v548, 0.0
    %v660 = vadd.f32 %v658, %v659
    %661 = vadd.xlane.f32.xlu0 %v660
    %v662 = vpop.xlane.xlu0 %661
    %v663 = vadd.f32 %v549, %v550
    %v664 = vsel %vm362, %v551, 0.0
    %v665 = vadd.f32 %v663, %v664
    %666 = vadd.xlane.f32.xlu0 %v665
    %v667 = vpop.xlane.xlu0 %666
    %v668 = vadd.f32 %v552, %v553
    %v669 = vsel %vm362, %v554, 0.0
    %v670 = vadd.f32 %v668, %v669
    %671 = vadd.xlane.f32.xlu0 %v670
    %v672 = vpop.xlane.xlu0 %671
    %v673 = vadd.f32 %v555, %v556
    %v674 = vsel %vm362, %v557, 0.0
    %v675 = vadd.f32 %v673, %v674
    %676 = vadd.xlane.f32.xlu0 %v675
    %v677 = vpop.xlane.xlu0 %676
    %v678 = vadd.f32 %v558, %v559
    %v679 = vsel %vm362, %v560, 0.0
    %v680 = vadd.f32 %v678, %v679
    %681 = vadd.xlane.f32.xlu0 %v680
    %v682 = vpop.xlane.xlu0 %681
    %v683 = vadd.f32 %v561, %v562
    %v684 = vsel %vm362, %v563, 0.0
    %v685 = vadd.f32 %v683, %v684
    %686 = vadd.xlane.f32.xlu0 %v685
    %v687 = vpop.xlane.xlu0 %686
    %v688 = vadd.f32 %v564, %v565
    %v689 = vsel %vm362, %v566, 0.0
    %v690 = vadd.f32 %v688, %v689
    %691 = vadd.xlane.f32.xlu0 %v690
    %v692 = vpop.xlane.xlu0 %691
    %v693 = vadd.f32 %v567, %v568
    %v694 = vsel %vm362, %v569, 0.0
    %v695 = vadd.f32 %v693, %v694
    %696 = vadd.xlane.f32.xlu0 %v695
    %v697 = vpop.xlane.xlu0 %696
    %v698 = vadd.f32 %v570, %v571
    %v699 = vsel %vm362, %v572, 0.0
    %v700 = vadd.f32 %v698, %v699
    %701 = vadd.xlane.f32.xlu0 %v700
    %v702 = vpop.xlane.xlu0 %701
    %v703 = vadd.f32 %v573, %v574
    %v704 = vsel %vm362, %v575, 0.0
    %v705 = vadd.f32 %v703, %v704
    %706 = vadd.xlane.f32.xlu0 %v705
    %v707 = vpop.xlane.xlu0 %706
    %v708 = vadd.f32 %v576, %v577
    %v709 = vsel %vm362, %v578, 0.0
    %v710 = vadd.f32 %v708, %v709
    %711 = vadd.xlane.f32.xlu0 %v710
    %v712 = vpop.xlane.xlu0 %711
    %v713 = vadd.f32 %v579, %v580
    %v714 = vsel %vm362, %v581, 0.0
    %v715 = vadd.f32 %v713, %v714
    %716 = vadd.xlane.f32.xlu0 %v715
    %v717 = vpop.xlane.xlu0 %716
    %v718 = vadd.f32 %v582, %v583
    %v719 = vsel %vm362, %v584, 0.0
    %v720 = vadd.f32 %v718, %v719
    %721 = vadd.xlane.f32.xlu0 %v720
    %v722 = vpop.xlane.xlu0 %721
    %v723 = vadd.f32 %v585, %v586
    %v724 = vsel %vm362, %v587, 0.0
    %v725 = vadd.f32 %v723, %v724
    %726 = vadd.xlane.f32.xlu0 %v725
    %v727 = vpop.xlane.xlu0 %726
    %v728 = vadd.f32 %v588, %v589
    %v729 = vsel %vm362, %v590, 0.0
    %v730 = vadd.f32 %v728, %v729
    %731 = vadd.xlane.f32.xlu0 %v730
    %v732 = vpop.xlane.xlu0 %731
    %v733 = vadd.f32 %v591, %v592
    %v734 = vsel %vm362, %v593, 0.0
    %v735 = vadd.f32 %v733, %v734
    %736 = vadd.xlane.f32.xlu0 %v735
    %v737 = vpop.xlane.xlu0 %736
    %v738 = vadd.f32 %v594, %v595
    %v739 = vsel %vm362, %v596, 0.0
    %v740 = vadd.f32 %v738, %v739
    %741 = vadd.xlane.f32.xlu0 %v740
    %v742 = vpop.xlane.xlu0 %741
    %v743 = vadd.f32 %v597, %v598
    %v744 = vsel %vm362, %v599, 0.0
    %v745 = vadd.f32 %v743, %v744
    %746 = vadd.xlane.f32.xlu0 %v745
    %v747 = vpop.xlane.xlu0 %746
    %v748 = vadd.f32 %v600, %v601
    %v749 = vsel %vm362, %v602, 0.0
    %v750 = vadd.f32 %v748, %v749
    %751 = vadd.xlane.f32.xlu0 %v750
    %v752 = vpop.xlane.xlu0 %751
    %v753 = vadd.f32 %v603, %v604
    %v754 = vsel %vm362, %v605, 0.0
    %v755 = vadd.f32 %v753, %v754
    %756 = vadd.xlane.f32.xlu0 %v755
    %v757 = vpop.xlane.xlu0 %756
    %v758 = vadd.f32 %v606, %v607
    %v759 = vsel %vm362, %v608, 0.0
    %v760 = vadd.f32 %v758, %v759
    %761 = vadd.xlane.f32.xlu0 %v760
    %v762 = vpop.xlane.xlu0 %761
    %v763 = vadd.f32 %v609, %v610
    %v764 = vsel %vm362, %v611, 0.0
    %v765 = vadd.f32 %v763, %v764
    %766 = vadd.xlane.f32.xlu0 %v765
    %v767 = vpop.xlane.xlu0 %766
    %v768 = vadd.f32 %v612, %v613
    %v769 = vsel %vm362, %v614, 0.0
    %v770 = vadd.f32 %v768, %v769
    %771 = vadd.xlane.f32.xlu0 %v770
    %v772 = vpop.xlane.xlu0 %771
    %v773 = vadd.f32 %v615, %v616
    %v774 = vsel %vm362, %v617, 0.0
    %v775 = vadd.f32 %v773, %v774
    %776 = vadd.xlane.f32.xlu0 %v775
    %v777 = vpop.xlane.xlu0 %776
    %v778 = vmul.f32 %v366, %v366
    %v779 = vmul.f32 %v371, %v371
    %v780 = vmul.f32 %v376, %v376
    %v781 = vmul.f32 %v381, %v381
    %v782 = vmul.f32 %v386, %v386
    %v783 = vmul.f32 %v391, %v391
    %v784 = vmul.f32 %v396, %v396
    %v785 = vmul.f32 %v401, %v401
    %v786 = vmul.f32 %v406, %v406
    %v787 = vmul.f32 %v411, %v411
    %v788 = vmul.f32 %v416, %v416
    %v789 = vmul.f32 %v421, %v421
    %v790 = vmul.f32 %v426, %v426
    %v791 = vmul.f32 %v431, %v431
    %v792 = vmul.f32 %v436, %v436
    %v793 = vmul.f32 %v441, %v441
    %v794 = vmul.f32 %v446, %v446
    %v795 = vmul.f32 %v451, %v451
    %v796 = vmul.f32 %v456, %v456
    %v797 = vmul.f32 %v461, %v461
    %v798 = vmul.f32 %v466, %v466
    %v799 = vmul.f32 %v471, %v471
    %v800 = vmul.f32 %v476, %v476
    %v801 = vmul.f32 %v481, %v481
    %v802 = vmul.f32 %v486, %v486
    %v803 = vmul.f32 %v491, %v491
    %v804 = vmul.f32 %v496, %v496
    %v805 = vmul.f32 %v501, %v501
    %v806 = vmul.f32 %v506, %v506
    %v807 = vmul.f32 %v511, %v511
    %v808 = vmul.f32 %v516, %v516
    %v809 = vmul.f32 %v521, %v521
    %v810 = vmul.f32 %v778, 0.003125
    %v811 = vmul.f32 %v779, 0.003125
    %v812 = vmul.f32 %v780, 0.003125
    %v813 = vmul.f32 %v781, 0.003125
    %v814 = vmul.f32 %v782, 0.003125
    %v815 = vmul.f32 %v783, 0.003125
    %v816 = vmul.f32 %v784, 0.003125
    %v817 = vmul.f32 %v785, 0.003125
    %v818 = vmul.f32 %v786, 0.003125
    %v819 = vmul.f32 %v787, 0.003125
    %v820 = vmul.f32 %v788, 0.003125
    %v821 = vmul.f32 %v789, 0.003125
    %v822 = vmul.f32 %v790, 0.003125
    %v823 = vmul.f32 %v791, 0.003125
    %v824 = vmul.f32 %v792, 0.003125
    %v825 = vmul.f32 %v793, 0.003125
    %v826 = vmul.f32 %v794, 0.003125
    %v827 = vmul.f32 %v795, 0.003125
    %v828 = vmul.f32 %v796, 0.003125
    %v829 = vmul.f32 %v797, 0.003125
    %v830 = vmul.f32 %v798, 0.003125
    %v831 = vmul.f32 %v799, 0.003125
    %v832 = vmul.f32 %v800, 0.003125
    %v833 = vmul.f32 %v801, 0.003125
    %v834 = vmul.f32 %v802, 0.003125
    %v835 = vmul.f32 %v803, 0.003125
    %v836 = vmul.f32 %v804, 0.003125
    %v837 = vmul.f32 %v805, 0.003125
    %v838 = vmul.f32 %v806, 0.003125
    %v839 = vmul.f32 %v807, 0.003125
    %v840 = vmul.f32 %v808, 0.003125
    %v841 = vmul.f32 %v809, 0.003125
    %v842 = vsub.f32 %v622, %v810
    %v843 = vsub.f32 %v627, %v811
    %v844 = vsub.f32 %v632, %v812
    %v845 = vsub.f32 %v637, %v813
    %v846 = vsub.f32 %v642, %v814
    %v847 = vsub.f32 %v647, %v815
    %v848 = vsub.f32 %v652, %v816
    %v849 = vsub.f32 %v657, %v817
    %v850 = vsub.f32 %v662, %v818
    %v851 = vsub.f32 %v667, %v819
    %v852 = vsub.f32 %v672, %v820
    %v853 = vsub.f32 %v677, %v821
    %v854 = vsub.f32 %v682, %v822
    %v855 = vsub.f32 %v687, %v823
    %v856 = vsub.f32 %v692, %v824
    %v857 = vsub.f32 %v697, %v825
    %v858 = vsub.f32 %v702, %v826
    %v859 = vsub.f32 %v707, %v827
    %v860 = vsub.f32 %v712, %v828
    %v861 = vsub.f32 %v717, %v829
    %v862 = vsub.f32 %v722, %v830
    %v863 = vsub.f32 %v727, %v831
    %v864 = vsub.f32 %v732, %v832
    %v865 = vsub.f32 %v737, %v833
    %v866 = vsub.f32 %v742, %v834
    %v867 = vsub.f32 %v747, %v835
    %v868 = vsub.f32 %v752, %v836
    %v869 = vsub.f32 %v757, %v837
    %v870 = vsub.f32 %v762, %v838
    %v871 = vsub.f32 %v767, %v839
    %v872 = vsub.f32 %v772, %v840
    %v873 = vsub.f32 %v777, %v841
    %v874 = vmul.f32 %v842, 0.0031347962
    %v875 = vmul.f32 %v843, 0.0031347962
    %v876 = vmul.f32 %v844, 0.0031347962
    %v877 = vmul.f32 %v845, 0.0031347962
    %v878 = vmul.f32 %v846, 0.0031347962
    %v879 = vmul.f32 %v847, 0.0031347962
    %v880 = vmul.f32 %v848, 0.0031347962
    %v881 = vmul.f32 %v849, 0.0031347962
    %v882 = vmul.f32 %v850, 0.0031347962
    %v883 = vmul.f32 %v851, 0.0031347962
    %v884 = vmul.f32 %v852, 0.0031347962
    %v885 = vmul.f32 %v853, 0.0031347962
    %v886 = vmul.f32 %v854, 0.0031347962
    %v887 = vmul.f32 %v855, 0.0031347962
    %v888 = vmul.f32 %v856, 0.0031347962
    %v889 = vmul.f32 %v857, 0.0031347962
    %v890 = vmul.f32 %v858, 0.0031347962
    %v891 = vmul.f32 %v859, 0.0031347962
    %v892 = vmul.f32 %v860, 0.0031347962
    %v893 = vmul.f32 %v861, 0.0031347962
    %v894 = vmul.f32 %v862, 0.0031347962
    %v895 = vmul.f32 %v863, 0.0031347962
    %v896 = vmul.f32 %v864, 0.0031347962
    %v897 = vmul.f32 %v865, 0.0031347962
    %v898 = vmul.f32 %v866, 0.0031347962
    %v899 = vmul.f32 %v867, 0.0031347962
    %v900 = vmul.f32 %v868, 0.0031347962
    %v901 = vmul.f32 %v869, 0.0031347962
    %v902 = vmul.f32 %v870, 0.0031347962
    %v903 = vmul.f32 %v871, 0.0031347962
    %v904 = vmul.f32 %v872, 0.0031347962
    %v905 = vmul.f32 %v873, 0.0031347962
    %v938 = vlaneseq
    %v939 = vshrl.u32 %v938, 7
    %v940 = vsub.s32 0, %v939
    %v941 = vrot.slane %v874, %v940
    %v942 = vlaneseq
    %v943 = vshrl.u32 %v942, 7
    %v944 = vsub.s32 1, %v943
    %v945 = vrot.slane %v874, %v944
    %v946 = vlaneseq
    %v947 = vshrl.u32 %v946, 7
    %v948 = vsub.s32 2, %v947
    %v949 = vrot.slane %v874, %v948
    %v950 = vlaneseq
    %v951 = vshrl.u32 %v950, 7
    %v952 = vsub.s32 3, %v951
    %v953 = vrot.slane %v874, %v952
    %v954 = vlaneseq
    %v955 = vshrl.u32 %v954, 7
    %v956 = vsub.s32 4, %v955
    %v957 = vrot.slane %v874, %v956
    %v958 = vlaneseq
    %v959 = vshrl.u32 %v958, 7
    %v960 = vsub.s32 5, %v959
    %v961 = vrot.slane %v874, %v960
    %v962 = vlaneseq
    %v963 = vshrl.u32 %v962, 7
    %v964 = vsub.s32 6, %v963
    %v965 = vrot.slane %v874, %v964
    %v966 = vlaneseq
    %v967 = vshrl.u32 %v966, 7
    %v968 = vsub.s32 7, %v967
    %v969 = vrot.slane %v874, %v968
    %v970 = vlaneseq
    %v971 = vshrl.u32 %v970, 7
    %v972 = vsub.s32 0, %v971
    %v973 = vrot.slane %v875, %v972
    %v974 = vlaneseq
    %v975 = vshrl.u32 %v974, 7
    %v976 = vsub.s32 1, %v975
    %v977 = vrot.slane %v875, %v976
    %v978 = vlaneseq
    %v979 = vshrl.u32 %v978, 7
    %v980 = vsub.s32 2, %v979
    %v981 = vrot.slane %v875, %v980
    %v982 = vlaneseq
    %v983 = vshrl.u32 %v982, 7
    %v984 = vsub.s32 3, %v983
    %v985 = vrot.slane %v875, %v984
    %v986 = vlaneseq
    %v987 = vshrl.u32 %v986, 7
    %v988 = vsub.s32 4, %v987
    %v989 = vrot.slane %v875, %v988
    %v990 = vlaneseq
    %v991 = vshrl.u32 %v990, 7
    %v992 = vsub.s32 5, %v991
    %v993 = vrot.slane %v875, %v992
    %v994 = vlaneseq
    %v995 = vshrl.u32 %v994, 7
    %v996 = vsub.s32 6, %v995
    %v997 = vrot.slane %v875, %v996
    %v998 = vlaneseq
    %v999 = vshrl.u32 %v998, 7
    %v1000 = vsub.s32 7, %v999
    %v1001 = vrot.slane %v875, %v1000
    %v1002 = vlaneseq
    %v1003 = vshrl.u32 %v1002, 7
    %v1004 = vsub.s32 0, %v1003
    %v1005 = vrot.slane %v876, %v1004
    %v1006 = vlaneseq
    %v1007 = vshrl.u32 %v1006, 7
    %v1008 = vsub.s32 1, %v1007
    %v1009 = vrot.slane %v876, %v1008
    %v1010 = vlaneseq
    %v1011 = vshrl.u32 %v1010, 7
    %v1012 = vsub.s32 2, %v1011
    %v1013 = vrot.slane %v876, %v1012
    %v1014 = vlaneseq
    %v1015 = vshrl.u32 %v1014, 7
    %v1016 = vsub.s32 3, %v1015
    %v1017 = vrot.slane %v876, %v1016
    %v1018 = vlaneseq
    %v1019 = vshrl.u32 %v1018, 7
    %v1020 = vsub.s32 4, %v1019
    %v1021 = vrot.slane %v876, %v1020
    %v1022 = vlaneseq
    %v1023 = vshrl.u32 %v1022, 7
    %v1024 = vsub.s32 5, %v1023
    %v1025 = vrot.slane %v876, %v1024
    %v1026 = vlaneseq
    %v1027 = vshrl.u32 %v1026, 7
    %v1028 = vsub.s32 6, %v1027
    %v1029 = vrot.slane %v876, %v1028
    %v1030 = vlaneseq
    %v1031 = vshrl.u32 %v1030, 7
    %v1032 = vsub.s32 7, %v1031
    %v1033 = vrot.slane %v876, %v1032
    %v1034 = vlaneseq
    %v1035 = vshrl.u32 %v1034, 7
    %v1036 = vsub.s32 0, %v1035
    %v1037 = vrot.slane %v877, %v1036
    %v1038 = vlaneseq
    %v1039 = vshrl.u32 %v1038, 7
    %v1040 = vsub.s32 1, %v1039
    %v1041 = vrot.slane %v877, %v1040
    %v1042 = vlaneseq
    %v1043 = vshrl.u32 %v1042, 7
    %v1044 = vsub.s32 2, %v1043
    %v1045 = vrot.slane %v877, %v1044
    %v1046 = vlaneseq
    %v1047 = vshrl.u32 %v1046, 7
    %v1048 = vsub.s32 3, %v1047
    %v1049 = vrot.slane %v877, %v1048
    %v1050 = vlaneseq
    %v1051 = vshrl.u32 %v1050, 7
    %v1052 = vsub.s32 4, %v1051
    %v1053 = vrot.slane %v877, %v1052
    %v1054 = vlaneseq
    %v1055 = vshrl.u32 %v1054, 7
    %v1056 = vsub.s32 5, %v1055
    %v1057 = vrot.slane %v877, %v1056
    %v1058 = vlaneseq
    %v1059 = vshrl.u32 %v1058, 7
    %v1060 = vsub.s32 6, %v1059
    %v1061 = vrot.slane %v877, %v1060
    %v1062 = vlaneseq
    %v1063 = vshrl.u32 %v1062, 7
    %v1064 = vsub.s32 7, %v1063
    %v1065 = vrot.slane %v877, %v1064
    %v1066 = vlaneseq
    %v1067 = vshrl.u32 %v1066, 7
    %v1068 = vsub.s32 0, %v1067
    %v1069 = vrot.slane %v878, %v1068
    %v1070 = vlaneseq
    %v1071 = vshrl.u32 %v1070, 7
    %v1072 = vsub.s32 1, %v1071
    %v1073 = vrot.slane %v878, %v1072
    %v1074 = vlaneseq
    %v1075 = vshrl.u32 %v1074, 7
    %v1076 = vsub.s32 2, %v1075
    %v1077 = vrot.slane %v878, %v1076
    %v1078 = vlaneseq
    %v1079 = vshrl.u32 %v1078, 7
    %v1080 = vsub.s32 3, %v1079
    %v1081 = vrot.slane %v878, %v1080
    %v1082 = vlaneseq
    %v1083 = vshrl.u32 %v1082, 7
    %v1084 = vsub.s32 4, %v1083
    %v1085 = vrot.slane %v878, %v1084
    %v1086 = vlaneseq
    %v1087 = vshrl.u32 %v1086, 7
    %v1088 = vsub.s32 5, %v1087
    %v1089 = vrot.slane %v878, %v1088
    %v1090 = vlaneseq
    %v1091 = vshrl.u32 %v1090, 7
    %v1092 = vsub.s32 6, %v1091
    %v1093 = vrot.slane %v878, %v1092
    %v1094 = vlaneseq
    %v1095 = vshrl.u32 %v1094, 7
    %v1096 = vsub.s32 7, %v1095
    %v1097 = vrot.slane %v878, %v1096
    %v1098 = vlaneseq
    %v1099 = vshrl.u32 %v1098, 7
    %v1100 = vsub.s32 0, %v1099
    %v1101 = vrot.slane %v879, %v1100
    %v1102 = vlaneseq
    %v1103 = vshrl.u32 %v1102, 7
    %v1104 = vsub.s32 1, %v1103
    %v1105 = vrot.slane %v879, %v1104
    %v1106 = vlaneseq
    %v1107 = vshrl.u32 %v1106, 7
    %v1108 = vsub.s32 2, %v1107
    %v1109 = vrot.slane %v879, %v1108
    %v1110 = vlaneseq
    %v1111 = vshrl.u32 %v1110, 7
    %v1112 = vsub.s32 3, %v1111
    %v1113 = vrot.slane %v879, %v1112
    %v1114 = vlaneseq
    %v1115 = vshrl.u32 %v1114, 7
    %v1116 = vsub.s32 4, %v1115
    %v1117 = vrot.slane %v879, %v1116
    %v1118 = vlaneseq
    %v1119 = vshrl.u32 %v1118, 7
    %v1120 = vsub.s32 5, %v1119
    %v1121 = vrot.slane %v879, %v1120
    %v1122 = vlaneseq
    %v1123 = vshrl.u32 %v1122, 7
    %v1124 = vsub.s32 6, %v1123
    %v1125 = vrot.slane %v879, %v1124
    %v1126 = vlaneseq
    %v1127 = vshrl.u32 %v1126, 7
    %v1128 = vsub.s32 7, %v1127
    %v1129 = vrot.slane %v879, %v1128
    %v1130 = vlaneseq
    %v1131 = vshrl.u32 %v1130, 7
    %v1132 = vsub.s32 0, %v1131
    %v1133 = vrot.slane %v880, %v1132
    %v1134 = vlaneseq
    %v1135 = vshrl.u32 %v1134, 7
    %v1136 = vsub.s32 1, %v1135
    %v1137 = vrot.slane %v880, %v1136
    %v1138 = vlaneseq
    %v1139 = vshrl.u32 %v1138, 7
    %v1140 = vsub.s32 2, %v1139
    %v1141 = vrot.slane %v880, %v1140
    %v1142 = vlaneseq
    %v1143 = vshrl.u32 %v1142, 7
    %v1144 = vsub.s32 3, %v1143
    %v1145 = vrot.slane %v880, %v1144
    %v1146 = vlaneseq
    %v1147 = vshrl.u32 %v1146, 7
    %v1148 = vsub.s32 4, %v1147
    %v1149 = vrot.slane %v880, %v1148
    %v1150 = vlaneseq
    %v1151 = vshrl.u32 %v1150, 7
    %v1152 = vsub.s32 5, %v1151
    %v1153 = vrot.slane %v880, %v1152
    %v1154 = vlaneseq
    %v1155 = vshrl.u32 %v1154, 7
    %v1156 = vsub.s32 6, %v1155
    %v1157 = vrot.slane %v880, %v1156
    %v1158 = vlaneseq
    %v1159 = vshrl.u32 %v1158, 7
    %v1160 = vsub.s32 7, %v1159
    %v1161 = vrot.slane %v880, %v1160
    %v1162 = vlaneseq
    %v1163 = vshrl.u32 %v1162, 7
    %v1164 = vsub.s32 0, %v1163
    %v1165 = vrot.slane %v881, %v1164
    %v1166 = vlaneseq
    %v1167 = vshrl.u32 %v1166, 7
    %v1168 = vsub.s32 1, %v1167
    %v1169 = vrot.slane %v881, %v1168
    %v1170 = vlaneseq
    %v1171 = vshrl.u32 %v1170, 7
    %v1172 = vsub.s32 2, %v1171
    %v1173 = vrot.slane %v881, %v1172
    %v1174 = vlaneseq
    %v1175 = vshrl.u32 %v1174, 7
    %v1176 = vsub.s32 3, %v1175
    %v1177 = vrot.slane %v881, %v1176
    %v1178 = vlaneseq
    %v1179 = vshrl.u32 %v1178, 7
    %v1180 = vsub.s32 4, %v1179
    %v1181 = vrot.slane %v881, %v1180
    %v1182 = vlaneseq
    %v1183 = vshrl.u32 %v1182, 7
    %v1184 = vsub.s32 5, %v1183
    %v1185 = vrot.slane %v881, %v1184
    %v1186 = vlaneseq
    %v1187 = vshrl.u32 %v1186, 7
    %v1188 = vsub.s32 6, %v1187
    %v1189 = vrot.slane %v881, %v1188
    %v1190 = vlaneseq
    %v1191 = vshrl.u32 %v1190, 7
    %v1192 = vsub.s32 7, %v1191
    %v1193 = vrot.slane %v881, %v1192
    %v1194 = vlaneseq
    %v1195 = vshrl.u32 %v1194, 7
    %v1196 = vsub.s32 0, %v1195
    %v1197 = vrot.slane %v882, %v1196
    %v1198 = vlaneseq
    %v1199 = vshrl.u32 %v1198, 7
    %v1200 = vsub.s32 1, %v1199
    %v1201 = vrot.slane %v882, %v1200
    %v1202 = vlaneseq
    %v1203 = vshrl.u32 %v1202, 7
    %v1204 = vsub.s32 2, %v1203
    %v1205 = vrot.slane %v882, %v1204
    %v1206 = vlaneseq
    %v1207 = vshrl.u32 %v1206, 7
    %v1208 = vsub.s32 3, %v1207
    %v1209 = vrot.slane %v882, %v1208
    %v1210 = vlaneseq
    %v1211 = vshrl.u32 %v1210, 7
    %v1212 = vsub.s32 4, %v1211
    %v1213 = vrot.slane %v882, %v1212
    %v1214 = vlaneseq
    %v1215 = vshrl.u32 %v1214, 7
    %v1216 = vsub.s32 5, %v1215
    %v1217 = vrot.slane %v882, %v1216
    %v1218 = vlaneseq
    %v1219 = vshrl.u32 %v1218, 7
    %v1220 = vsub.s32 6, %v1219
    %v1221 = vrot.slane %v882, %v1220
    %v1222 = vlaneseq
    %v1223 = vshrl.u32 %v1222, 7
    %v1224 = vsub.s32 7, %v1223
    %v1225 = vrot.slane %v882, %v1224
    %v1226 = vlaneseq
    %v1227 = vshrl.u32 %v1226, 7
    %v1228 = vsub.s32 0, %v1227
    %v1229 = vrot.slane %v883, %v1228
    %v1230 = vlaneseq
    %v1231 = vshrl.u32 %v1230, 7
    %v1232 = vsub.s32 1, %v1231
    %v1233 = vrot.slane %v883, %v1232
    %v1234 = vlaneseq
    %v1235 = vshrl.u32 %v1234, 7
    %v1236 = vsub.s32 2, %v1235
    %v1237 = vrot.slane %v883, %v1236
    %v1238 = vlaneseq
    %v1239 = vshrl.u32 %v1238, 7
    %v1240 = vsub.s32 3, %v1239
    %v1241 = vrot.slane %v883, %v1240
    %v1242 = vlaneseq
    %v1243 = vshrl.u32 %v1242, 7
    %v1244 = vsub.s32 4, %v1243
    %v1245 = vrot.slane %v883, %v1244
    %v1246 = vlaneseq
    %v1247 = vshrl.u32 %v1246, 7
    %v1248 = vsub.s32 5, %v1247
    %v1249 = vrot.slane %v883, %v1248
    %v1250 = vlaneseq
    %v1251 = vshrl.u32 %v1250, 7
    %v1252 = vsub.s32 6, %v1251
    %v1253 = vrot.slane %v883, %v1252
    %v1254 = vlaneseq
    %v1255 = vshrl.u32 %v1254, 7
    %v1256 = vsub.s32 7, %v1255
    %v1257 = vrot.slane %v883, %v1256
    %v1258 = vlaneseq
    %v1259 = vshrl.u32 %v1258, 7
    %v1260 = vsub.s32 0, %v1259
    %v1261 = vrot.slane %v884, %v1260
    %v1262 = vlaneseq
    %v1263 = vshrl.u32 %v1262, 7
    %v1264 = vsub.s32 1, %v1263
    %v1265 = vrot.slane %v884, %v1264
    %v1266 = vlaneseq
    %v1267 = vshrl.u32 %v1266, 7
    %v1268 = vsub.s32 2, %v1267
    %v1269 = vrot.slane %v884, %v1268
    %v1270 = vlaneseq
    %v1271 = vshrl.u32 %v1270, 7
    %v1272 = vsub.s32 3, %v1271
    %v1273 = vrot.slane %v884, %v1272
    %v1274 = vlaneseq
    %v1275 = vshrl.u32 %v1274, 7
    %v1276 = vsub.s32 4, %v1275
    %v1277 = vrot.slane %v884, %v1276
    %v1278 = vlaneseq
    %v1279 = vshrl.u32 %v1278, 7
    %v1280 = vsub.s32 5, %v1279
    %v1281 = vrot.slane %v884, %v1280
    %v1282 = vlaneseq
    %v1283 = vshrl.u32 %v1282, 7
    %v1284 = vsub.s32 6, %v1283
    %v1285 = vrot.slane %v884, %v1284
    %v1286 = vlaneseq
    %v1287 = vshrl.u32 %v1286, 7
    %v1288 = vsub.s32 7, %v1287
    %v1289 = vrot.slane %v884, %v1288
    %v1290 = vlaneseq
    %v1291 = vshrl.u32 %v1290, 7
    %v1292 = vsub.s32 0, %v1291
    %v1293 = vrot.slane %v885, %v1292
    %v1294 = vlaneseq
    %v1295 = vshrl.u32 %v1294, 7
    %v1296 = vsub.s32 1, %v1295
    %v1297 = vrot.slane %v885, %v1296
    %v1298 = vlaneseq
    %v1299 = vshrl.u32 %v1298, 7
    %v1300 = vsub.s32 2, %v1299
    %v1301 = vrot.slane %v885, %v1300
    %v1302 = vlaneseq
    %v1303 = vshrl.u32 %v1302, 7
    %v1304 = vsub.s32 3, %v1303
    %v1305 = vrot.slane %v885, %v1304
    %v1306 = vlaneseq
    %v1307 = vshrl.u32 %v1306, 7
    %v1308 = vsub.s32 4, %v1307
    %v1309 = vrot.slane %v885, %v1308
    %v1310 = vlaneseq
    %v1311 = vshrl.u32 %v1310, 7
    %v1312 = vsub.s32 5, %v1311
    %v1313 = vrot.slane %v885, %v1312
    %v1314 = vlaneseq
    %v1315 = vshrl.u32 %v1314, 7
    %v1316 = vsub.s32 6, %v1315
    %v1317 = vrot.slane %v885, %v1316
    %v1318 = vlaneseq
    %v1319 = vshrl.u32 %v1318, 7
    %v1320 = vsub.s32 7, %v1319
    %v1321 = vrot.slane %v885, %v1320
    %v1322 = vlaneseq
    %v1323 = vshrl.u32 %v1322, 7
    %v1324 = vsub.s32 0, %v1323
    %v1325 = vrot.slane %v886, %v1324
    %v1326 = vlaneseq
    %v1327 = vshrl.u32 %v1326, 7
    %v1328 = vsub.s32 1, %v1327
    %v1329 = vrot.slane %v886, %v1328
    %v1330 = vlaneseq
    %v1331 = vshrl.u32 %v1330, 7
    %v1332 = vsub.s32 2, %v1331
    %v1333 = vrot.slane %v886, %v1332
    %v1334 = vlaneseq
    %v1335 = vshrl.u32 %v1334, 7
    %v1336 = vsub.s32 3, %v1335
    %v1337 = vrot.slane %v886, %v1336
    %v1338 = vlaneseq
    %v1339 = vshrl.u32 %v1338, 7
    %v1340 = vsub.s32 4, %v1339
    %v1341 = vrot.slane %v886, %v1340
    %v1342 = vlaneseq
    %v1343 = vshrl.u32 %v1342, 7
    %v1344 = vsub.s32 5, %v1343
    %v1345 = vrot.slane %v886, %v1344
    %v1346 = vlaneseq
    %v1347 = vshrl.u32 %v1346, 7
    %v1348 = vsub.s32 6, %v1347
    %v1349 = vrot.slane %v886, %v1348
    %v1350 = vlaneseq
    %v1351 = vshrl.u32 %v1350, 7
    %v1352 = vsub.s32 7, %v1351
    %v1353 = vrot.slane %v886, %v1352
    %v1354 = vlaneseq
    %v1355 = vshrl.u32 %v1354, 7
    %v1356 = vsub.s32 0, %v1355
    %v1357 = vrot.slane %v887, %v1356
    %v1358 = vlaneseq
    %v1359 = vshrl.u32 %v1358, 7
    %v1360 = vsub.s32 1, %v1359
    %v1361 = vrot.slane %v887, %v1360
    %v1362 = vlaneseq
    %v1363 = vshrl.u32 %v1362, 7
    %v1364 = vsub.s32 2, %v1363
    %v1365 = vrot.slane %v887, %v1364
    %v1366 = vlaneseq
    %v1367 = vshrl.u32 %v1366, 7
    %v1368 = vsub.s32 3, %v1367
    %v1369 = vrot.slane %v887, %v1368
    %v1370 = vlaneseq
    %v1371 = vshrl.u32 %v1370, 7
    %v1372 = vsub.s32 4, %v1371
    %v1373 = vrot.slane %v887, %v1372
    %v1374 = vlaneseq
    %v1375 = vshrl.u32 %v1374, 7
    %v1376 = vsub.s32 5, %v1375
    %v1377 = vrot.slane %v887, %v1376
    %v1378 = vlaneseq
    %v1379 = vshrl.u32 %v1378, 7
    %v1380 = vsub.s32 6, %v1379
    %v1381 = vrot.slane %v887, %v1380
    %v1382 = vlaneseq
    %v1383 = vshrl.u32 %v1382, 7
    %v1384 = vsub.s32 7, %v1383
    %v1385 = vrot.slane %v887, %v1384
    %v1386 = vlaneseq
    %v1387 = vshrl.u32 %v1386, 7
    %v1388 = vsub.s32 0, %v1387
    %v1389 = vrot.slane %v888, %v1388
    %v1390 = vlaneseq
    %v1391 = vshrl.u32 %v1390, 7
    %v1392 = vsub.s32 1, %v1391
    %v1393 = vrot.slane %v888, %v1392
    %v1394 = vlaneseq
    %v1395 = vshrl.u32 %v1394, 7
    %v1396 = vsub.s32 2, %v1395
    %v1397 = vrot.slane %v888, %v1396
    %v1398 = vlaneseq
    %v1399 = vshrl.u32 %v1398, 7
    %v1400 = vsub.s32 3, %v1399
    %v1401 = vrot.slane %v888, %v1400
    %v1402 = vlaneseq
    %v1403 = vshrl.u32 %v1402, 7
    %v1404 = vsub.s32 4, %v1403
    %v1405 = vrot.slane %v888, %v1404
    %v1406 = vlaneseq
    %v1407 = vshrl.u32 %v1406, 7
    %v1408 = vsub.s32 5, %v1407
    %v1409 = vrot.slane %v888, %v1408
    %v1410 = vlaneseq
    %v1411 = vshrl.u32 %v1410, 7
    %v1412 = vsub.s32 6, %v1411
    %v1413 = vrot.slane %v888, %v1412
    %v1414 = vlaneseq
    %v1415 = vshrl.u32 %v1414, 7
    %v1416 = vsub.s32 7, %v1415
    %v1417 = vrot.slane %v888, %v1416
    %v1418 = vlaneseq
    %v1419 = vshrl.u32 %v1418, 7
    %v1420 = vsub.s32 0, %v1419
    %v1421 = vrot.slane %v889, %v1420
    %v1422 = vlaneseq
    %v1423 = vshrl.u32 %v1422, 7
    %v1424 = vsub.s32 1, %v1423
    %v1425 = vrot.slane %v889, %v1424
    %v1426 = vlaneseq
    %v1427 = vshrl.u32 %v1426, 7
    %v1428 = vsub.s32 2, %v1427
    %v1429 = vrot.slane %v889, %v1428
    %v1430 = vlaneseq
    %v1431 = vshrl.u32 %v1430, 7
    %v1432 = vsub.s32 3, %v1431
    %v1433 = vrot.slane %v889, %v1432
    %v1434 = vlaneseq
    %v1435 = vshrl.u32 %v1434, 7
    %v1436 = vsub.s32 4, %v1435
    %v1437 = vrot.slane %v889, %v1436
    %v1438 = vlaneseq
    %v1439 = vshrl.u32 %v1438, 7
    %v1440 = vsub.s32 5, %v1439
    %v1441 = vrot.slane %v889, %v1440
    %v1442 = vlaneseq
    %v1443 = vshrl.u32 %v1442, 7
    %v1444 = vsub.s32 6, %v1443
    %v1445 = vrot.slane %v889, %v1444
    %v1446 = vlaneseq
    %v1447 = vshrl.u32 %v1446, 7
    %v1448 = vsub.s32 7, %v1447
    %v1449 = vrot.slane %v889, %v1448
    %v1450 = vlaneseq
    %v1451 = vshrl.u32 %v1450, 7
    %v1452 = vsub.s32 0, %v1451
    %v1453 = vrot.slane %v890, %v1452
    %v1454 = vlaneseq
    %v1455 = vshrl.u32 %v1454, 7
    %v1456 = vsub.s32 1, %v1455
    %v1457 = vrot.slane %v890, %v1456
    %v1458 = vlaneseq
    %v1459 = vshrl.u32 %v1458, 7
    %v1460 = vsub.s32 2, %v1459
    %v1461 = vrot.slane %v890, %v1460
    %v1462 = vlaneseq
    %v1463 = vshrl.u32 %v1462, 7
    %v1464 = vsub.s32 3, %v1463
    %v1465 = vrot.slane %v890, %v1464
    %v1466 = vlaneseq
    %v1467 = vshrl.u32 %v1466, 7
    %v1468 = vsub.s32 4, %v1467
    %v1469 = vrot.slane %v890, %v1468
    %v1470 = vlaneseq
    %v1471 = vshrl.u32 %v1470, 7
    %v1472 = vsub.s32 5, %v1471
    %v1473 = vrot.slane %v890, %v1472
    %v1474 = vlaneseq
    %v1475 = vshrl.u32 %v1474, 7
    %v1476 = vsub.s32 6, %v1475
    %v1477 = vrot.slane %v890, %v1476
    %v1478 = vlaneseq
    %v1479 = vshrl.u32 %v1478, 7
    %v1480 = vsub.s32 7, %v1479
    %v1481 = vrot.slane %v890, %v1480
    %v1482 = vlaneseq
    %v1483 = vshrl.u32 %v1482, 7
    %v1484 = vsub.s32 0, %v1483
    %v1485 = vrot.slane %v891, %v1484
    %v1486 = vlaneseq
    %v1487 = vshrl.u32 %v1486, 7
    %v1488 = vsub.s32 1, %v1487
    %v1489 = vrot.slane %v891, %v1488
    %v1490 = vlaneseq
    %v1491 = vshrl.u32 %v1490, 7
    %v1492 = vsub.s32 2, %v1491
    %v1493 = vrot.slane %v891, %v1492
    %v1494 = vlaneseq
    %v1495 = vshrl.u32 %v1494, 7
    %v1496 = vsub.s32 3, %v1495
    %v1497 = vrot.slane %v891, %v1496
    %v1498 = vlaneseq
    %v1499 = vshrl.u32 %v1498, 7
    %v1500 = vsub.s32 4, %v1499
    %v1501 = vrot.slane %v891, %v1500
    %v1502 = vlaneseq
    %v1503 = vshrl.u32 %v1502, 7
    %v1504 = vsub.s32 5, %v1503
    %v1505 = vrot.slane %v891, %v1504
    %v1506 = vlaneseq
    %v1507 = vshrl.u32 %v1506, 7
    %v1508 = vsub.s32 6, %v1507
    %v1509 = vrot.slane %v891, %v1508
    %v1510 = vlaneseq
    %v1511 = vshrl.u32 %v1510, 7
    %v1512 = vsub.s32 7, %v1511
    %v1513 = vrot.slane %v891, %v1512
    %v1514 = vlaneseq
    %v1515 = vshrl.u32 %v1514, 7
    %v1516 = vsub.s32 0, %v1515
    %v1517 = vrot.slane %v892, %v1516
    %v1518 = vlaneseq
    %v1519 = vshrl.u32 %v1518, 7
    %v1520 = vsub.s32 1, %v1519
    %v1521 = vrot.slane %v892, %v1520
    %v1522 = vlaneseq
    %v1523 = vshrl.u32 %v1522, 7
    %v1524 = vsub.s32 2, %v1523
    %v1525 = vrot.slane %v892, %v1524
    %v1526 = vlaneseq
    %v1527 = vshrl.u32 %v1526, 7
    %v1528 = vsub.s32 3, %v1527
    %v1529 = vrot.slane %v892, %v1528
    %v1530 = vlaneseq
    %v1531 = vshrl.u32 %v1530, 7
    %v1532 = vsub.s32 4, %v1531
    %v1533 = vrot.slane %v892, %v1532
    %v1534 = vlaneseq
    %v1535 = vshrl.u32 %v1534, 7
    %v1536 = vsub.s32 5, %v1535
    %v1537 = vrot.slane %v892, %v1536
    %v1538 = vlaneseq
    %v1539 = vshrl.u32 %v1538, 7
    %v1540 = vsub.s32 6, %v1539
    %v1541 = vrot.slane %v892, %v1540
    %v1542 = vlaneseq
    %v1543 = vshrl.u32 %v1542, 7
    %v1544 = vsub.s32 7, %v1543
    %v1545 = vrot.slane %v892, %v1544
    %v1546 = vlaneseq
    %v1547 = vshrl.u32 %v1546, 7
    %v1548 = vsub.s32 0, %v1547
    %v1549 = vrot.slane %v893, %v1548
    %v1550 = vlaneseq
    %v1551 = vshrl.u32 %v1550, 7
    %v1552 = vsub.s32 1, %v1551
    %v1553 = vrot.slane %v893, %v1552
    %v1554 = vlaneseq
    %v1555 = vshrl.u32 %v1554, 7
    %v1556 = vsub.s32 2, %v1555
    %v1557 = vrot.slane %v893, %v1556
    %v1558 = vlaneseq
    %v1559 = vshrl.u32 %v1558, 7
    %v1560 = vsub.s32 3, %v1559
    %v1561 = vrot.slane %v893, %v1560
    %v1562 = vlaneseq
    %v1563 = vshrl.u32 %v1562, 7
    %v1564 = vsub.s32 4, %v1563
    %v1565 = vrot.slane %v893, %v1564
    %v1566 = vlaneseq
    %v1567 = vshrl.u32 %v1566, 7
    %v1568 = vsub.s32 5, %v1567
    %v1569 = vrot.slane %v893, %v1568
    %v1570 = vlaneseq
    %v1571 = vshrl.u32 %v1570, 7
    %v1572 = vsub.s32 6, %v1571
    %v1573 = vrot.slane %v893, %v1572
    %v1574 = vlaneseq
    %v1575 = vshrl.u32 %v1574, 7
    %v1576 = vsub.s32 7, %v1575
    %v1577 = vrot.slane %v893, %v1576
    %v1578 = vlaneseq
    %v1579 = vshrl.u32 %v1578, 7
    %v1580 = vsub.s32 0, %v1579
    %v1581 = vrot.slane %v894, %v1580
    %v1582 = vlaneseq
    %v1583 = vshrl.u32 %v1582, 7
    %v1584 = vsub.s32 1, %v1583
    %v1585 = vrot.slane %v894, %v1584
    %v1586 = vlaneseq
    %v1587 = vshrl.u32 %v1586, 7
    %v1588 = vsub.s32 2, %v1587
    %v1589 = vrot.slane %v894, %v1588
    %v1590 = vlaneseq
    %v1591 = vshrl.u32 %v1590, 7
    %v1592 = vsub.s32 3, %v1591
    %v1593 = vrot.slane %v894, %v1592
    %v1594 = vlaneseq
    %v1595 = vshrl.u32 %v1594, 7
    %v1596 = vsub.s32 4, %v1595
    %v1597 = vrot.slane %v894, %v1596
    %v1598 = vlaneseq
    %v1599 = vshrl.u32 %v1598, 7
    %v1600 = vsub.s32 5, %v1599
    %v1601 = vrot.slane %v894, %v1600
    %v1602 = vlaneseq
    %v1603 = vshrl.u32 %v1602, 7
    %v1604 = vsub.s32 6, %v1603
    %v1605 = vrot.slane %v894, %v1604
    %v1606 = vlaneseq
    %v1607 = vshrl.u32 %v1606, 7
    %v1608 = vsub.s32 7, %v1607
    %v1609 = vrot.slane %v894, %v1608
    %v1610 = vlaneseq
    %v1611 = vshrl.u32 %v1610, 7
    %v1612 = vsub.s32 0, %v1611
    %v1613 = vrot.slane %v895, %v1612
    %v1614 = vlaneseq
    %v1615 = vshrl.u32 %v1614, 7
    %v1616 = vsub.s32 1, %v1615
    %v1617 = vrot.slane %v895, %v1616
    %v1618 = vlaneseq
    %v1619 = vshrl.u32 %v1618, 7
    %v1620 = vsub.s32 2, %v1619
    %v1621 = vrot.slane %v895, %v1620
    %v1622 = vlaneseq
    %v1623 = vshrl.u32 %v1622, 7
    %v1624 = vsub.s32 3, %v1623
    %v1625 = vrot.slane %v895, %v1624
    %v1626 = vlaneseq
    %v1627 = vshrl.u32 %v1626, 7
    %v1628 = vsub.s32 4, %v1627
    %v1629 = vrot.slane %v895, %v1628
    %v1630 = vlaneseq
    %v1631 = vshrl.u32 %v1630, 7
    %v1632 = vsub.s32 5, %v1631
    %v1633 = vrot.slane %v895, %v1632
    %v1634 = vlaneseq
    %v1635 = vshrl.u32 %v1634, 7
    %v1636 = vsub.s32 6, %v1635
    %v1637 = vrot.slane %v895, %v1636
    %v1638 = vlaneseq
    %v1639 = vshrl.u32 %v1638, 7
    %v1640 = vsub.s32 7, %v1639
    %v1641 = vrot.slane %v895, %v1640
    %v1642 = vlaneseq
    %v1643 = vshrl.u32 %v1642, 7
    %v1644 = vsub.s32 0, %v1643
    %v1645 = vrot.slane %v896, %v1644
    %v1646 = vlaneseq
    %v1647 = vshrl.u32 %v1646, 7
    %v1648 = vsub.s32 1, %v1647
    %v1649 = vrot.slane %v896, %v1648
    %v1650 = vlaneseq
    %v1651 = vshrl.u32 %v1650, 7
    %v1652 = vsub.s32 2, %v1651
    %v1653 = vrot.slane %v896, %v1652
    %v1654 = vlaneseq
    %v1655 = vshrl.u32 %v1654, 7
    %v1656 = vsub.s32 3, %v1655
    %v1657 = vrot.slane %v896, %v1656
    %v1658 = vlaneseq
    %v1659 = vshrl.u32 %v1658, 7
    %v1660 = vsub.s32 4, %v1659
    %v1661 = vrot.slane %v896, %v1660
    %v1662 = vlaneseq
    %v1663 = vshrl.u32 %v1662, 7
    %v1664 = vsub.s32 5, %v1663
    %v1665 = vrot.slane %v896, %v1664
    %v1666 = vlaneseq
    %v1667 = vshrl.u32 %v1666, 7
    %v1668 = vsub.s32 6, %v1667
    %v1669 = vrot.slane %v896, %v1668
    %v1670 = vlaneseq
    %v1671 = vshrl.u32 %v1670, 7
    %v1672 = vsub.s32 7, %v1671
    %v1673 = vrot.slane %v896, %v1672
    %v1674 = vlaneseq
    %v1675 = vshrl.u32 %v1674, 7
    %v1676 = vsub.s32 0, %v1675
    %v1677 = vrot.slane %v897, %v1676
    %v1678 = vlaneseq
    %v1679 = vshrl.u32 %v1678, 7
    %v1680 = vsub.s32 1, %v1679
    %v1681 = vrot.slane %v897, %v1680
    %v1682 = vlaneseq
    %v1683 = vshrl.u32 %v1682, 7
    %v1684 = vsub.s32 2, %v1683
    %v1685 = vrot.slane %v897, %v1684
    %v1686 = vlaneseq
    %v1687 = vshrl.u32 %v1686, 7
    %v1688 = vsub.s32 3, %v1687
    %v1689 = vrot.slane %v897, %v1688
    %v1690 = vlaneseq
    %v1691 = vshrl.u32 %v1690, 7
    %v1692 = vsub.s32 4, %v1691
    %v1693 = vrot.slane %v897, %v1692
    %v1694 = vlaneseq
    %v1695 = vshrl.u32 %v1694, 7
    %v1696 = vsub.s32 5, %v1695
    %v1697 = vrot.slane %v897, %v1696
    %v1698 = vlaneseq
    %v1699 = vshrl.u32 %v1698, 7
    %v1700 = vsub.s32 6, %v1699
    %v1701 = vrot.slane %v897, %v1700
    %v1702 = vlaneseq
    %v1703 = vshrl.u32 %v1702, 7
    %v1704 = vsub.s32 7, %v1703
    %v1705 = vrot.slane %v897, %v1704
    %v1706 = vlaneseq
    %v1707 = vshrl.u32 %v1706, 7
    %v1708 = vsub.s32 0, %v1707
    %v1709 = vrot.slane %v898, %v1708
    %v1710 = vlaneseq
    %v1711 = vshrl.u32 %v1710, 7
    %v1712 = vsub.s32 1, %v1711
    %v1713 = vrot.slane %v898, %v1712
    %v1714 = vlaneseq
    %v1715 = vshrl.u32 %v1714, 7
    %v1716 = vsub.s32 2, %v1715
    %v1717 = vrot.slane %v898, %v1716
    %v1718 = vlaneseq
    %v1719 = vshrl.u32 %v1718, 7
    %v1720 = vsub.s32 3, %v1719
    %v1721 = vrot.slane %v898, %v1720
    %v1722 = vlaneseq
    %v1723 = vshrl.u32 %v1722, 7
    %v1724 = vsub.s32 4, %v1723
    %v1725 = vrot.slane %v898, %v1724
    %v1726 = vlaneseq
    %v1727 = vshrl.u32 %v1726, 7
    %v1728 = vsub.s32 5, %v1727
    %v1729 = vrot.slane %v898, %v1728
    %v1730 = vlaneseq
    %v1731 = vshrl.u32 %v1730, 7
    %v1732 = vsub.s32 6, %v1731
    %v1733 = vrot.slane %v898, %v1732
    %v1734 = vlaneseq
    %v1735 = vshrl.u32 %v1734, 7
    %v1736 = vsub.s32 7, %v1735
    %v1737 = vrot.slane %v898, %v1736
    %v1738 = vlaneseq
    %v1739 = vshrl.u32 %v1738, 7
    %v1740 = vsub.s32 0, %v1739
    %v1741 = vrot.slane %v899, %v1740
    %v1742 = vlaneseq
    %v1743 = vshrl.u32 %v1742, 7
    %v1744 = vsub.s32 1, %v1743
    %v1745 = vrot.slane %v899, %v1744
    %v1746 = vlaneseq
    %v1747 = vshrl.u32 %v1746, 7
    %v1748 = vsub.s32 2, %v1747
    %v1749 = vrot.slane %v899, %v1748
    %v1750 = vlaneseq
    %v1751 = vshrl.u32 %v1750, 7
    %v1752 = vsub.s32 3, %v1751
    %v1753 = vrot.slane %v899, %v1752
    %v1754 = vlaneseq
    %v1755 = vshrl.u32 %v1754, 7
    %v1756 = vsub.s32 4, %v1755
    %v1757 = vrot.slane %v899, %v1756
    %v1758 = vlaneseq
    %v1759 = vshrl.u32 %v1758, 7
    %v1760 = vsub.s32 5, %v1759
    %v1761 = vrot.slane %v899, %v1760
    %v1762 = vlaneseq
    %v1763 = vshrl.u32 %v1762, 7
    %v1764 = vsub.s32 6, %v1763
    %v1765 = vrot.slane %v899, %v1764
    %v1766 = vlaneseq
    %v1767 = vshrl.u32 %v1766, 7
    %v1768 = vsub.s32 7, %v1767
    %v1769 = vrot.slane %v899, %v1768
    %v1770 = vlaneseq
    %v1771 = vshrl.u32 %v1770, 7
    %v1772 = vsub.s32 0, %v1771
    %v1773 = vrot.slane %v900, %v1772
    %v1774 = vlaneseq
    %v1775 = vshrl.u32 %v1774, 7
    %v1776 = vsub.s32 1, %v1775
    %v1777 = vrot.slane %v900, %v1776
    %v1778 = vlaneseq
    %v1779 = vshrl.u32 %v1778, 7
    %v1780 = vsub.s32 2, %v1779
    %v1781 = vrot.slane %v900, %v1780
    %v1782 = vlaneseq
    %v1783 = vshrl.u32 %v1782, 7
    %v1784 = vsub.s32 3, %v1783
    %v1785 = vrot.slane %v900, %v1784
    %v1786 = vlaneseq
    %v1787 = vshrl.u32 %v1786, 7
    %v1788 = vsub.s32 4, %v1787
    %v1789 = vrot.slane %v900, %v1788
    %v1790 = vlaneseq
    %v1791 = vshrl.u32 %v1790, 7
    %v1792 = vsub.s32 5, %v1791
    %v1793 = vrot.slane %v900, %v1792
    %v1794 = vlaneseq
    %v1795 = vshrl.u32 %v1794, 7
    %v1796 = vsub.s32 6, %v1795
    %v1797 = vrot.slane %v900, %v1796
    %v1798 = vlaneseq
    %v1799 = vshrl.u32 %v1798, 7
    %v1800 = vsub.s32 7, %v1799
    %v1801 = vrot.slane %v900, %v1800
    %v1802 = vlaneseq
    %v1803 = vshrl.u32 %v1802, 7
    %v1804 = vsub.s32 0, %v1803
    %v1805 = vrot.slane %v901, %v1804
    %v1806 = vlaneseq
    %v1807 = vshrl.u32 %v1806, 7
    %v1808 = vsub.s32 1, %v1807
    %v1809 = vrot.slane %v901, %v1808
    %v1810 = vlaneseq
    %v1811 = vshrl.u32 %v1810, 7
    %v1812 = vsub.s32 2, %v1811
    %v1813 = vrot.slane %v901, %v1812
    %v1814 = vlaneseq
    %v1815 = vshrl.u32 %v1814, 7
    %v1816 = vsub.s32 3, %v1815
    %v1817 = vrot.slane %v901, %v1816
    %v1818 = vlaneseq
    %v1819 = vshrl.u32 %v1818, 7
    %v1820 = vsub.s32 4, %v1819
    %v1821 = vrot.slane %v901, %v1820
    %v1822 = vlaneseq
    %v1823 = vshrl.u32 %v1822, 7
    %v1824 = vsub.s32 5, %v1823
    %v1825 = vrot.slane %v901, %v1824
    %v1826 = vlaneseq
    %v1827 = vshrl.u32 %v1826, 7
    %v1828 = vsub.s32 6, %v1827
    %v1829 = vrot.slane %v901, %v1828
    %v1830 = vlaneseq
    %v1831 = vshrl.u32 %v1830, 7
    %v1832 = vsub.s32 7, %v1831
    %v1833 = vrot.slane %v901, %v1832
    %v1834 = vlaneseq
    %v1835 = vshrl.u32 %v1834, 7
    %v1836 = vsub.s32 0, %v1835
    %v1837 = vrot.slane %v902, %v1836
    %v1838 = vlaneseq
    %v1839 = vshrl.u32 %v1838, 7
    %v1840 = vsub.s32 1, %v1839
    %v1841 = vrot.slane %v902, %v1840
    %v1842 = vlaneseq
    %v1843 = vshrl.u32 %v1842, 7
    %v1844 = vsub.s32 2, %v1843
    %v1845 = vrot.slane %v902, %v1844
    %v1846 = vlaneseq
    %v1847 = vshrl.u32 %v1846, 7
    %v1848 = vsub.s32 3, %v1847
    %v1849 = vrot.slane %v902, %v1848
    %v1850 = vlaneseq
    %v1851 = vshrl.u32 %v1850, 7
    %v1852 = vsub.s32 4, %v1851
    %v1853 = vrot.slane %v902, %v1852
    %v1854 = vlaneseq
    %v1855 = vshrl.u32 %v1854, 7
    %v1856 = vsub.s32 5, %v1855
    %v1857 = vrot.slane %v902, %v1856
    %v1858 = vlaneseq
    %v1859 = vshrl.u32 %v1858, 7
    %v1860 = vsub.s32 6, %v1859
    %v1861 = vrot.slane %v902, %v1860
    %v1862 = vlaneseq
    %v1863 = vshrl.u32 %v1862, 7
    %v1864 = vsub.s32 7, %v1863
    %v1865 = vrot.slane %v902, %v1864
    %v1866 = vlaneseq
    %v1867 = vshrl.u32 %v1866, 7
    %v1868 = vsub.s32 0, %v1867
    %v1869 = vrot.slane %v903, %v1868
    %v1870 = vlaneseq
    %v1871 = vshrl.u32 %v1870, 7
    %v1872 = vsub.s32 1, %v1871
    %v1873 = vrot.slane %v903, %v1872
    %v1874 = vlaneseq
    %v1875 = vshrl.u32 %v1874, 7
    %v1876 = vsub.s32 2, %v1875
    %v1877 = vrot.slane %v903, %v1876
    %v1878 = vlaneseq
    %v1879 = vshrl.u32 %v1878, 7
    %v1880 = vsub.s32 3, %v1879
    %v1881 = vrot.slane %v903, %v1880
    %v1882 = vlaneseq
    %v1883 = vshrl.u32 %v1882, 7
    %v1884 = vsub.s32 4, %v1883
    %v1885 = vrot.slane %v903, %v1884
    %v1886 = vlaneseq
    %v1887 = vshrl.u32 %v1886, 7
    %v1888 = vsub.s32 5, %v1887
    %v1889 = vrot.slane %v903, %v1888
    %v1890 = vlaneseq
    %v1891 = vshrl.u32 %v1890, 7
    %v1892 = vsub.s32 6, %v1891
    %v1893 = vrot.slane %v903, %v1892
    %v1894 = vlaneseq
    %v1895 = vshrl.u32 %v1894, 7
    %v1896 = vsub.s32 7, %v1895
    %v1897 = vrot.slane %v903, %v1896
    %v1898 = vlaneseq
    %v1899 = vshrl.u32 %v1898, 7
    %v1900 = vsub.s32 0, %v1899
    %v1901 = vrot.slane %v904, %v1900
    %v1902 = vlaneseq
    %v1903 = vshrl.u32 %v1902, 7
    %v1904 = vsub.s32 1, %v1903
    %v1905 = vrot.slane %v904, %v1904
    %v1906 = vlaneseq
    %v1907 = vshrl.u32 %v1906, 7
    %v1908 = vsub.s32 2, %v1907
    %v1909 = vrot.slane %v904, %v1908
    %v1910 = vlaneseq
    %v1911 = vshrl.u32 %v1910, 7
    %v1912 = vsub.s32 3, %v1911
    %v1913 = vrot.slane %v904, %v1912
    %v1914 = vlaneseq
    %v1915 = vshrl.u32 %v1914, 7
    %v1916 = vsub.s32 4, %v1915
    %v1917 = vrot.slane %v904, %v1916
    %v1918 = vlaneseq
    %v1919 = vshrl.u32 %v1918, 7
    %v1920 = vsub.s32 5, %v1919
    %v1921 = vrot.slane %v904, %v1920
    %v1922 = vlaneseq
    %v1923 = vshrl.u32 %v1922, 7
    %v1924 = vsub.s32 6, %v1923
    %v1925 = vrot.slane %v904, %v1924
    %v1926 = vlaneseq
    %v1927 = vshrl.u32 %v1926, 7
    %v1928 = vsub.s32 7, %v1927
    %v1929 = vrot.slane %v904, %v1928
    %v1930 = vlaneseq
    %v1931 = vshrl.u32 %v1930, 7
    %v1932 = vsub.s32 0, %v1931
    %v1933 = vrot.slane %v905, %v1932
    %v1934 = vlaneseq
    %v1935 = vshrl.u32 %v1934, 7
    %v1936 = vsub.s32 1, %v1935
    %v1937 = vrot.slane %v905, %v1936
    %v1938 = vlaneseq
    %v1939 = vshrl.u32 %v1938, 7
    %v1940 = vsub.s32 2, %v1939
    %v1941 = vrot.slane %v905, %v1940
    %v1942 = vlaneseq
    %v1943 = vshrl.u32 %v1942, 7
    %v1944 = vsub.s32 3, %v1943
    %v1945 = vrot.slane %v905, %v1944
    %v1946 = vlaneseq
    %v1947 = vshrl.u32 %v1946, 7
    %v1948 = vsub.s32 4, %v1947
    %v1949 = vrot.slane %v905, %v1948
    %v1950 = vlaneseq
    %v1951 = vshrl.u32 %v1950, 7
    %v1952 = vsub.s32 5, %v1951
    %v1953 = vrot.slane %v905, %v1952
    %v1954 = vlaneseq
    %v1955 = vshrl.u32 %v1954, 7
    %v1956 = vsub.s32 6, %v1955
    %v1957 = vrot.slane %v905, %v1956
    %v1958 = vlaneseq
    %v1959 = vshrl.u32 %v1958, 7
    %v1960 = vsub.s32 7, %v1959
    %v1961 = vrot.slane %v905, %v1960
    %v1962 = vcombine.low %v941, %v945
    %v1963 = vcombine.low %v949, %v953
    %v1964 = vcombine.low %v957, %v961
    %v1965 = vcombine.low %v965, %v969
    %v1967 = vunpack.c.l.s4 1966171168
    %v1968 = vunpack.c.0.s8 %v1967
    %v1969 = vlaneseq
    %v1970 = vshrl.u32 %v1969, 7
    %v1971 = vsub.s32 %v1968, %v1970
    %v1972 = vrot.slane %v1962, %v1971
    %v1974 = vunpack.c.l.s4 1966171168
    %v1975 = vunpack.c.0.s8 %v1974
    %v1976 = vlaneseq
    %v1977 = vshrl.u32 %v1976, 7
    %v1978 = vsub.s32 %v1975, %v1977
    %v1979 = vrot.slane %v1963, %v1978
    %v1981 = vunpack.c.l.s4 1966171168
    %v1982 = vunpack.c.0.s8 %v1981
    %v1983 = vlaneseq
    %v1984 = vshrl.u32 %v1983, 7
    %v1985 = vsub.s32 %v1982, %v1984
    %v1986 = vrot.slane %v1964, %v1985
    %v1988 = vunpack.c.l.s4 1966171168
    %v1989 = vunpack.c.0.s8 %v1988
    %v1990 = vlaneseq
    %v1991 = vshrl.u32 %v1990, 7
    %v1992 = vsub.s32 %v1989, %v1991
    %v1993 = vrot.slane %v1965, %v1992
    %v1994 = vcombine.low %v1972, %v1979
    %v1995 = vcombine.low %v1986, %v1993
    %v1997 = vunpack.c.l.s4 1966171168
    %v1998 = vunpack.c.0.s8 %v1997
    %v1999 = vlaneseq
    %v2000 = vshrl.u32 %v1999, 7
    %v2001 = vsub.s32 %v1998, %v2000
    %v2002 = vrot.slane %v1994, %v2001
    %v2004 = vunpack.c.l.s4 1966171168
    %v2005 = vunpack.c.0.s8 %v2004
    %v2006 = vlaneseq
    %v2007 = vshrl.u32 %v2006, 7
    %v2008 = vsub.s32 %v2005, %v2007
    %v2009 = vrot.slane %v1995, %v2008
    %v2010 = vcombine.low %v2002, %v2009
    %v2011 = vcombine.low %v973, %v977
    %v2012 = vcombine.low %v981, %v985
    %v2013 = vcombine.low %v989, %v993
    %v2014 = vcombine.low %v997, %v1001
    %v2016 = vunpack.c.l.s4 1966171168
    %v2017 = vunpack.c.0.s8 %v2016
    %v2018 = vlaneseq
    %v2019 = vshrl.u32 %v2018, 7
    %v2020 = vsub.s32 %v2017, %v2019
    %v2021 = vrot.slane %v2011, %v2020
    %v2023 = vunpack.c.l.s4 1966171168
    %v2024 = vunpack.c.0.s8 %v2023
    %v2025 = vlaneseq
    %v2026 = vshrl.u32 %v2025, 7
    %v2027 = vsub.s32 %v2024, %v2026
    %v2028 = vrot.slane %v2012, %v2027
    %v2030 = vunpack.c.l.s4 1966171168
    %v2031 = vunpack.c.0.s8 %v2030
    %v2032 = vlaneseq
    %v2033 = vshrl.u32 %v2032, 7
    %v2034 = vsub.s32 %v2031, %v2033
    %v2035 = vrot.slane %v2013, %v2034
    %v2037 = vunpack.c.l.s4 1966171168
    %v2038 = vunpack.c.0.s8 %v2037
    %v2039 = vlaneseq
    %v2040 = vshrl.u32 %v2039, 7
    %v2041 = vsub.s32 %v2038, %v2040
    %v2042 = vrot.slane %v2014, %v2041
    %v2043 = vcombine.low %v2021, %v2028
    %v2044 = vcombine.low %v2035, %v2042
    %v2046 = vunpack.c.l.s4 1966171168
    %v2047 = vunpack.c.0.s8 %v2046
    %v2048 = vlaneseq
    %v2049 = vshrl.u32 %v2048, 7
    %v2050 = vsub.s32 %v2047, %v2049
    %v2051 = vrot.slane %v2043, %v2050
    %v2053 = vunpack.c.l.s4 1966171168
    %v2054 = vunpack.c.0.s8 %v2053
    %v2055 = vlaneseq
    %v2056 = vshrl.u32 %v2055, 7
    %v2057 = vsub.s32 %v2054, %v2056
    %v2058 = vrot.slane %v2044, %v2057
    %v2059 = vcombine.low %v2051, %v2058
    %v2060 = vcombine.low %v1005, %v1009
    %v2061 = vcombine.low %v1013, %v1017
    %v2062 = vcombine.low %v1021, %v1025
    %v2063 = vcombine.low %v1029, %v1033
    %v2065 = vunpack.c.l.s4 1966171168
    %v2066 = vunpack.c.0.s8 %v2065
    %v2067 = vlaneseq
    %v2068 = vshrl.u32 %v2067, 7
    %v2069 = vsub.s32 %v2066, %v2068
    %v2070 = vrot.slane %v2060, %v2069
    %v2072 = vunpack.c.l.s4 1966171168
    %v2073 = vunpack.c.0.s8 %v2072
    %v2074 = vlaneseq
    %v2075 = vshrl.u32 %v2074, 7
    %v2076 = vsub.s32 %v2073, %v2075
    %v2077 = vrot.slane %v2061, %v2076
    %v2079 = vunpack.c.l.s4 1966171168
    %v2080 = vunpack.c.0.s8 %v2079
    %v2081 = vlaneseq
    %v2082 = vshrl.u32 %v2081, 7
    %v2083 = vsub.s32 %v2080, %v2082
    %v2084 = vrot.slane %v2062, %v2083
    %v2086 = vunpack.c.l.s4 1966171168
    %v2087 = vunpack.c.0.s8 %v2086
    %v2088 = vlaneseq
    %v2089 = vshrl.u32 %v2088, 7
    %v2090 = vsub.s32 %v2087, %v2089
    %v2091 = vrot.slane %v2063, %v2090
    %v2092 = vcombine.low %v2070, %v2077
    %v2093 = vcombine.low %v2084, %v2091
    %v2095 = vunpack.c.l.s4 1966171168
    %v2096 = vunpack.c.0.s8 %v2095
    %v2097 = vlaneseq
    %v2098 = vshrl.u32 %v2097, 7
    %v2099 = vsub.s32 %v2096, %v2098
    %v2100 = vrot.slane %v2092, %v2099
    %v2102 = vunpack.c.l.s4 1966171168
    %v2103 = vunpack.c.0.s8 %v2102
    %v2104 = vlaneseq
    %v2105 = vshrl.u32 %v2104, 7
    %v2106 = vsub.s32 %v2103, %v2105
    %v2107 = vrot.slane %v2093, %v2106
    %v2108 = vcombine.low %v2100, %v2107
    %v2109 = vcombine.low %v1037, %v1041
    %v2110 = vcombine.low %v1045, %v1049
    %v2111 = vcombine.low %v1053, %v1057
    %v2112 = vcombine.low %v1061, %v1065
    %v2114 = vunpack.c.l.s4 1966171168
    %v2115 = vunpack.c.0.s8 %v2114
    %v2116 = vlaneseq
    %v2117 = vshrl.u32 %v2116, 7
    %v2118 = vsub.s32 %v2115, %v2117
    %v2119 = vrot.slane %v2109, %v2118
    %v2121 = vunpack.c.l.s4 1966171168
    %v2122 = vunpack.c.0.s8 %v2121
    %v2123 = vlaneseq
    %v2124 = vshrl.u32 %v2123, 7
    %v2125 = vsub.s32 %v2122, %v2124
    %v2126 = vrot.slane %v2110, %v2125
    %v2128 = vunpack.c.l.s4 1966171168
    %v2129 = vunpack.c.0.s8 %v2128
    %v2130 = vlaneseq
    %v2131 = vshrl.u32 %v2130, 7
    %v2132 = vsub.s32 %v2129, %v2131
    %v2133 = vrot.slane %v2111, %v2132
    %v2135 = vunpack.c.l.s4 1966171168
    %v2136 = vunpack.c.0.s8 %v2135
    %v2137 = vlaneseq
    %v2138 = vshrl.u32 %v2137, 7
    %v2139 = vsub.s32 %v2136, %v2138
    %v2140 = vrot.slane %v2112, %v2139
    %v2141 = vcombine.low %v2119, %v2126
    %v2142 = vcombine.low %v2133, %v2140
    %v2144 = vunpack.c.l.s4 1966171168
    %v2145 = vunpack.c.0.s8 %v2144
    %v2146 = vlaneseq
    %v2147 = vshrl.u32 %v2146, 7
    %v2148 = vsub.s32 %v2145, %v2147
    %v2149 = vrot.slane %v2141, %v2148
    %v2151 = vunpack.c.l.s4 1966171168
    %v2152 = vunpack.c.0.s8 %v2151
    %v2153 = vlaneseq
    %v2154 = vshrl.u32 %v2153, 7
    %v2155 = vsub.s32 %v2152, %v2154
    %v2156 = vrot.slane %v2142, %v2155
    %v2157 = vcombine.low %v2149, %v2156
    %v2158 = vcombine.low %v1069, %v1073
    %v2159 = vcombine.low %v1077, %v1081
    %v2160 = vcombine.low %v1085, %v1089
    %v2161 = vcombine.low %v1093, %v1097
    %v2163 = vunpack.c.l.s4 1966171168
    %v2164 = vunpack.c.0.s8 %v2163
    %v2165 = vlaneseq
    %v2166 = vshrl.u32 %v2165, 7
    %v2167 = vsub.s32 %v2164, %v2166
    %v2168 = vrot.slane %v2158, %v2167
    %v2170 = vunpack.c.l.s4 1966171168
    %v2171 = vunpack.c.0.s8 %v2170
    %v2172 = vlaneseq
    %v2173 = vshrl.u32 %v2172, 7
    %v2174 = vsub.s32 %v2171, %v2173
    %v2175 = vrot.slane %v2159, %v2174
    %v2177 = vunpack.c.l.s4 1966171168
    %v2178 = vunpack.c.0.s8 %v2177
    %v2179 = vlaneseq
    %v2180 = vshrl.u32 %v2179, 7
    %v2181 = vsub.s32 %v2178, %v2180
    %v2182 = vrot.slane %v2160, %v2181
    %v2184 = vunpack.c.l.s4 1966171168
    %v2185 = vunpack.c.0.s8 %v2184
    %v2186 = vlaneseq
    %v2187 = vshrl.u32 %v2186, 7
    %v2188 = vsub.s32 %v2185, %v2187
    %v2189 = vrot.slane %v2161, %v2188
    %v2190 = vcombine.low %v2168, %v2175
    %v2191 = vcombine.low %v2182, %v2189
    %v2193 = vunpack.c.l.s4 1966171168
    %v2194 = vunpack.c.0.s8 %v2193
    %v2195 = vlaneseq
    %v2196 = vshrl.u32 %v2195, 7
    %v2197 = vsub.s32 %v2194, %v2196
    %v2198 = vrot.slane %v2190, %v2197
    %v2200 = vunpack.c.l.s4 1966171168
    %v2201 = vunpack.c.0.s8 %v2200
    %v2202 = vlaneseq
    %v2203 = vshrl.u32 %v2202, 7
    %v2204 = vsub.s32 %v2201, %v2203
    %v2205 = vrot.slane %v2191, %v2204
    %v2206 = vcombine.low %v2198, %v2205
    %v2207 = vcombine.low %v1101, %v1105
    %v2208 = vcombine.low %v1109, %v1113
    %v2209 = vcombine.low %v1117, %v1121
    %v2210 = vcombine.low %v1125, %v1129
    %v2212 = vunpack.c.l.s4 1966171168
    %v2213 = vunpack.c.0.s8 %v2212
    %v2214 = vlaneseq
    %v2215 = vshrl.u32 %v2214, 7
    %v2216 = vsub.s32 %v2213, %v2215
    %v2217 = vrot.slane %v2207, %v2216
    %v2219 = vunpack.c.l.s4 1966171168
    %v2220 = vunpack.c.0.s8 %v2219
    %v2221 = vlaneseq
    %v2222 = vshrl.u32 %v2221, 7
    %v2223 = vsub.s32 %v2220, %v2222
    %v2224 = vrot.slane %v2208, %v2223
    %v2226 = vunpack.c.l.s4 1966171168
    %v2227 = vunpack.c.0.s8 %v2226
    %v2228 = vlaneseq
    %v2229 = vshrl.u32 %v2228, 7
    %v2230 = vsub.s32 %v2227, %v2229
    %v2231 = vrot.slane %v2209, %v2230
    %v2233 = vunpack.c.l.s4 1966171168
    %v2234 = vunpack.c.0.s8 %v2233
    %v2235 = vlaneseq
    %v2236 = vshrl.u32 %v2235, 7
    %v2237 = vsub.s32 %v2234, %v2236
    %v2238 = vrot.slane %v2210, %v2237
    %v2239 = vcombine.low %v2217, %v2224
    %v2240 = vcombine.low %v2231, %v2238
    %v2242 = vunpack.c.l.s4 1966171168
    %v2243 = vunpack.c.0.s8 %v2242
    %v2244 = vlaneseq
    %v2245 = vshrl.u32 %v2244, 7
    %v2246 = vsub.s32 %v2243, %v2245
    %v2247 = vrot.slane %v2239, %v2246
    %v2249 = vunpack.c.l.s4 1966171168
    %v2250 = vunpack.c.0.s8 %v2249
    %v2251 = vlaneseq
    %v2252 = vshrl.u32 %v2251, 7
    %v2253 = vsub.s32 %v2250, %v2252
    %v2254 = vrot.slane %v2240, %v2253
    %v2255 = vcombine.low %v2247, %v2254
    %v2256 = vcombine.low %v1133, %v1137
    %v2257 = vcombine.low %v1141, %v1145
    %v2258 = vcombine.low %v1149, %v1153
    %v2259 = vcombine.low %v1157, %v1161
    %v2261 = vunpack.c.l.s4 1966171168
    %v2262 = vunpack.c.0.s8 %v2261
    %v2263 = vlaneseq
    %v2264 = vshrl.u32 %v2263, 7
    %v2265 = vsub.s32 %v2262, %v2264
    %v2266 = vrot.slane %v2256, %v2265
    %v2268 = vunpack.c.l.s4 1966171168
    %v2269 = vunpack.c.0.s8 %v2268
    %v2270 = vlaneseq
    %v2271 = vshrl.u32 %v2270, 7
    %v2272 = vsub.s32 %v2269, %v2271
    %v2273 = vrot.slane %v2257, %v2272
    %v2275 = vunpack.c.l.s4 1966171168
    %v2276 = vunpack.c.0.s8 %v2275
    %v2277 = vlaneseq
    %v2278 = vshrl.u32 %v2277, 7
    %v2279 = vsub.s32 %v2276, %v2278
    %v2280 = vrot.slane %v2258, %v2279
    %v2282 = vunpack.c.l.s4 1966171168
    %v2283 = vunpack.c.0.s8 %v2282
    %v2284 = vlaneseq
    %v2285 = vshrl.u32 %v2284, 7
    %v2286 = vsub.s32 %v2283, %v2285
    %v2287 = vrot.slane %v2259, %v2286
    %v2288 = vcombine.low %v2266, %v2273
    %v2289 = vcombine.low %v2280, %v2287
    %v2291 = vunpack.c.l.s4 1966171168
    %v2292 = vunpack.c.0.s8 %v2291
    %v2293 = vlaneseq
    %v2294 = vshrl.u32 %v2293, 7
    %v2295 = vsub.s32 %v2292, %v2294
    %v2296 = vrot.slane %v2288, %v2295
    %v2298 = vunpack.c.l.s4 1966171168
    %v2299 = vunpack.c.0.s8 %v2298
    %v2300 = vlaneseq
    %v2301 = vshrl.u32 %v2300, 7
    %v2302 = vsub.s32 %v2299, %v2301
    %v2303 = vrot.slane %v2289, %v2302
    %v2304 = vcombine.low %v2296, %v2303
    %v2305 = vcombine.low %v1165, %v1169
    %v2306 = vcombine.low %v1173, %v1177
    %v2307 = vcombine.low %v1181, %v1185
    %v2308 = vcombine.low %v1189, %v1193
    %v2310 = vunpack.c.l.s4 1966171168
    %v2311 = vunpack.c.0.s8 %v2310
    %v2312 = vlaneseq
    %v2313 = vshrl.u32 %v2312, 7
    %v2314 = vsub.s32 %v2311, %v2313
    %v2315 = vrot.slane %v2305, %v2314
    %v2317 = vunpack.c.l.s4 1966171168
    %v2318 = vunpack.c.0.s8 %v2317
    %v2319 = vlaneseq
    %v2320 = vshrl.u32 %v2319, 7
    %v2321 = vsub.s32 %v2318, %v2320
    %v2322 = vrot.slane %v2306, %v2321
    %v2324 = vunpack.c.l.s4 1966171168
    %v2325 = vunpack.c.0.s8 %v2324
    %v2326 = vlaneseq
    %v2327 = vshrl.u32 %v2326, 7
    %v2328 = vsub.s32 %v2325, %v2327
    %v2329 = vrot.slane %v2307, %v2328
    %v2331 = vunpack.c.l.s4 1966171168
    %v2332 = vunpack.c.0.s8 %v2331
    %v2333 = vlaneseq
    %v2334 = vshrl.u32 %v2333, 7
    %v2335 = vsub.s32 %v2332, %v2334
    %v2336 = vrot.slane %v2308, %v2335
    %v2337 = vcombine.low %v2315, %v2322
    %v2338 = vcombine.low %v2329, %v2336
    %v2340 = vunpack.c.l.s4 1966171168
    %v2341 = vunpack.c.0.s8 %v2340
    %v2342 = vlaneseq
    %v2343 = vshrl.u32 %v2342, 7
    %v2344 = vsub.s32 %v2341, %v2343
    %v2345 = vrot.slane %v2337, %v2344
    %v2347 = vunpack.c.l.s4 1966171168
    %v2348 = vunpack.c.0.s8 %v2347
    %v2349 = vlaneseq
    %v2350 = vshrl.u32 %v2349, 7
    %v2351 = vsub.s32 %v2348, %v2350
    %v2352 = vrot.slane %v2338, %v2351
    %v2353 = vcombine.low %v2345, %v2352
    %v2354 = vcombine.low %v1197, %v1201
    %v2355 = vcombine.low %v1205, %v1209
    %v2356 = vcombine.low %v1213, %v1217
    %v2357 = vcombine.low %v1221, %v1225
    %v2359 = vunpack.c.l.s4 1966171168
    %v2360 = vunpack.c.0.s8 %v2359
    %v2361 = vlaneseq
    %v2362 = vshrl.u32 %v2361, 7
    %v2363 = vsub.s32 %v2360, %v2362
    %v2364 = vrot.slane %v2354, %v2363
    %v2366 = vunpack.c.l.s4 1966171168
    %v2367 = vunpack.c.0.s8 %v2366
    %v2368 = vlaneseq
    %v2369 = vshrl.u32 %v2368, 7
    %v2370 = vsub.s32 %v2367, %v2369
    %v2371 = vrot.slane %v2355, %v2370
    %v2373 = vunpack.c.l.s4 1966171168
    %v2374 = vunpack.c.0.s8 %v2373
    %v2375 = vlaneseq
    %v2376 = vshrl.u32 %v2375, 7
    %v2377 = vsub.s32 %v2374, %v2376
    %v2378 = vrot.slane %v2356, %v2377
    %v2380 = vunpack.c.l.s4 1966171168
    %v2381 = vunpack.c.0.s8 %v2380
    %v2382 = vlaneseq
    %v2383 = vshrl.u32 %v2382, 7
    %v2384 = vsub.s32 %v2381, %v2383
    %v2385 = vrot.slane %v2357, %v2384
    %v2386 = vcombine.low %v2364, %v2371
    %v2387 = vcombine.low %v2378, %v2385
    %v2389 = vunpack.c.l.s4 1966171168
    %v2390 = vunpack.c.0.s8 %v2389
    %v2391 = vlaneseq
    %v2392 = vshrl.u32 %v2391, 7
    %v2393 = vsub.s32 %v2390, %v2392
    %v2394 = vrot.slane %v2386, %v2393
    %v2396 = vunpack.c.l.s4 1966171168
    %v2397 = vunpack.c.0.s8 %v2396
    %v2398 = vlaneseq
    %v2399 = vshrl.u32 %v2398, 7
    %v2400 = vsub.s32 %v2397, %v2399
    %v2401 = vrot.slane %v2387, %v2400
    %v2402 = vcombine.low %v2394, %v2401
    %v2403 = vcombine.low %v1229, %v1233
    %v2404 = vcombine.low %v1237, %v1241
    %v2405 = vcombine.low %v1245, %v1249
    %v2406 = vcombine.low %v1253, %v1257
    %v2408 = vunpack.c.l.s4 1966171168
    %v2409 = vunpack.c.0.s8 %v2408
    %v2410 = vlaneseq
    %v2411 = vshrl.u32 %v2410, 7
    %v2412 = vsub.s32 %v2409, %v2411
    %v2413 = vrot.slane %v2403, %v2412
    %v2415 = vunpack.c.l.s4 1966171168
    %v2416 = vunpack.c.0.s8 %v2415
    %v2417 = vlaneseq
    %v2418 = vshrl.u32 %v2417, 7
    %v2419 = vsub.s32 %v2416, %v2418
    %v2420 = vrot.slane %v2404, %v2419
    %v2422 = vunpack.c.l.s4 1966171168
    %v2423 = vunpack.c.0.s8 %v2422
    %v2424 = vlaneseq
    %v2425 = vshrl.u32 %v2424, 7
    %v2426 = vsub.s32 %v2423, %v2425
    %v2427 = vrot.slane %v2405, %v2426
    %v2429 = vunpack.c.l.s4 1966171168
    %v2430 = vunpack.c.0.s8 %v2429
    %v2431 = vlaneseq
    %v2432 = vshrl.u32 %v2431, 7
    %v2433 = vsub.s32 %v2430, %v2432
    %v2434 = vrot.slane %v2406, %v2433
    %v2435 = vcombine.low %v2413, %v2420
    %v2436 = vcombine.low %v2427, %v2434
    %v2438 = vunpack.c.l.s4 1966171168
    %v2439 = vunpack.c.0.s8 %v2438
    %v2440 = vlaneseq
    %v2441 = vshrl.u32 %v2440, 7
    %v2442 = vsub.s32 %v2439, %v2441
    %v2443 = vrot.slane %v2435, %v2442
    %v2445 = vunpack.c.l.s4 1966171168
    %v2446 = vunpack.c.0.s8 %v2445
    %v2447 = vlaneseq
    %v2448 = vshrl.u32 %v2447, 7
    %v2449 = vsub.s32 %v2446, %v2448
    %v2450 = vrot.slane %v2436, %v2449
    %v2451 = vcombine.low %v2443, %v2450
    %v2452 = vcombine.low %v1261, %v1265
    %v2453 = vcombine.low %v1269, %v1273
    %v2454 = vcombine.low %v1277, %v1281
    %v2455 = vcombine.low %v1285, %v1289
    %v2457 = vunpack.c.l.s4 1966171168
    %v2458 = vunpack.c.0.s8 %v2457
    %v2459 = vlaneseq
    %v2460 = vshrl.u32 %v2459, 7
    %v2461 = vsub.s32 %v2458, %v2460
    %v2462 = vrot.slane %v2452, %v2461
    %v2464 = vunpack.c.l.s4 1966171168
    %v2465 = vunpack.c.0.s8 %v2464
    %v2466 = vlaneseq
    %v2467 = vshrl.u32 %v2466, 7
    %v2468 = vsub.s32 %v2465, %v2467
    %v2469 = vrot.slane %v2453, %v2468
    %v2471 = vunpack.c.l.s4 1966171168
    %v2472 = vunpack.c.0.s8 %v2471
    %v2473 = vlaneseq
    %v2474 = vshrl.u32 %v2473, 7
    %v2475 = vsub.s32 %v2472, %v2474
    %v2476 = vrot.slane %v2454, %v2475
    %v2478 = vunpack.c.l.s4 1966171168
    %v2479 = vunpack.c.0.s8 %v2478
    %v2480 = vlaneseq
    %v2481 = vshrl.u32 %v2480, 7
    %v2482 = vsub.s32 %v2479, %v2481
    %v2483 = vrot.slane %v2455, %v2482
    %v2484 = vcombine.low %v2462, %v2469
    %v2485 = vcombine.low %v2476, %v2483
    %v2487 = vunpack.c.l.s4 1966171168
    %v2488 = vunpack.c.0.s8 %v2487
    %v2489 = vlaneseq
    %v2490 = vshrl.u32 %v2489, 7
    %v2491 = vsub.s32 %v2488, %v2490
    %v2492 = vrot.slane %v2484, %v2491
    %v2494 = vunpack.c.l.s4 1966171168
    %v2495 = vunpack.c.0.s8 %v2494
    %v2496 = vlaneseq
    %v2497 = vshrl.u32 %v2496, 7
    %v2498 = vsub.s32 %v2495, %v2497
    %v2499 = vrot.slane %v2485, %v2498
    %v2500 = vcombine.low %v2492, %v2499
    %v2501 = vcombine.low %v1293, %v1297
    %v2502 = vcombine.low %v1301, %v1305
    %v2503 = vcombine.low %v1309, %v1313
    %v2504 = vcombine.low %v1317, %v1321
    %v2506 = vunpack.c.l.s4 1966171168
    %v2507 = vunpack.c.0.s8 %v2506
    %v2508 = vlaneseq
    %v2509 = vshrl.u32 %v2508, 7
    %v2510 = vsub.s32 %v2507, %v2509
    %v2511 = vrot.slane %v2501, %v2510
    %v2513 = vunpack.c.l.s4 1966171168
    %v2514 = vunpack.c.0.s8 %v2513
    %v2515 = vlaneseq
    %v2516 = vshrl.u32 %v2515, 7
    %v2517 = vsub.s32 %v2514, %v2516
    %v2518 = vrot.slane %v2502, %v2517
    %v2520 = vunpack.c.l.s4 1966171168
    %v2521 = vunpack.c.0.s8 %v2520
    %v2522 = vlaneseq
    %v2523 = vshrl.u32 %v2522, 7
    %v2524 = vsub.s32 %v2521, %v2523
    %v2525 = vrot.slane %v2503, %v2524
    %v2527 = vunpack.c.l.s4 1966171168
    %v2528 = vunpack.c.0.s8 %v2527
    %v2529 = vlaneseq
    %v2530 = vshrl.u32 %v2529, 7
    %v2531 = vsub.s32 %v2528, %v2530
    %v2532 = vrot.slane %v2504, %v2531
    %v2533 = vcombine.low %v2511, %v2518
    %v2534 = vcombine.low %v2525, %v2532
    %v2536 = vunpack.c.l.s4 1966171168
    %v2537 = vunpack.c.0.s8 %v2536
    %v2538 = vlaneseq
    %v2539 = vshrl.u32 %v2538, 7
    %v2540 = vsub.s32 %v2537, %v2539
    %v2541 = vrot.slane %v2533, %v2540
    %v2543 = vunpack.c.l.s4 1966171168
    %v2544 = vunpack.c.0.s8 %v2543
    %v2545 = vlaneseq
    %v2546 = vshrl.u32 %v2545, 7
    %v2547 = vsub.s32 %v2544, %v2546
    %v2548 = vrot.slane %v2534, %v2547
    %v2549 = vcombine.low %v2541, %v2548
    %v2550 = vcombine.low %v1325, %v1329
    %v2551 = vcombine.low %v1333, %v1337
    %v2552 = vcombine.low %v1341, %v1345
    %v2553 = vcombine.low %v1349, %v1353
    %v2555 = vunpack.c.l.s4 1966171168
    %v2556 = vunpack.c.0.s8 %v2555
    %v2557 = vlaneseq
    %v2558 = vshrl.u32 %v2557, 7
    %v2559 = vsub.s32 %v2556, %v2558
    %v2560 = vrot.slane %v2550, %v2559
    %v2562 = vunpack.c.l.s4 1966171168
    %v2563 = vunpack.c.0.s8 %v2562
    %v2564 = vlaneseq
    %v2565 = vshrl.u32 %v2564, 7
    %v2566 = vsub.s32 %v2563, %v2565
    %v2567 = vrot.slane %v2551, %v2566
    %v2569 = vunpack.c.l.s4 1966171168
    %v2570 = vunpack.c.0.s8 %v2569
    %v2571 = vlaneseq
    %v2572 = vshrl.u32 %v2571, 7
    %v2573 = vsub.s32 %v2570, %v2572
    %v2574 = vrot.slane %v2552, %v2573
    %v2576 = vunpack.c.l.s4 1966171168
    %v2577 = vunpack.c.0.s8 %v2576
    %v2578 = vlaneseq
    %v2579 = vshrl.u32 %v2578, 7
    %v2580 = vsub.s32 %v2577, %v2579
    %v2581 = vrot.slane %v2553, %v2580
    %v2582 = vcombine.low %v2560, %v2567
    %v2583 = vcombine.low %v2574, %v2581
    %v2585 = vunpack.c.l.s4 1966171168
    %v2586 = vunpack.c.0.s8 %v2585
    %v2587 = vlaneseq
    %v2588 = vshrl.u32 %v2587, 7
    %v2589 = vsub.s32 %v2586, %v2588
    %v2590 = vrot.slane %v2582, %v2589
    %v2592 = vunpack.c.l.s4 1966171168
    %v2593 = vunpack.c.0.s8 %v2592
    %v2594 = vlaneseq
    %v2595 = vshrl.u32 %v2594, 7
    %v2596 = vsub.s32 %v2593, %v2595
    %v2597 = vrot.slane %v2583, %v2596
    %v2598 = vcombine.low %v2590, %v2597
    %v2599 = vcombine.low %v1357, %v1361
    %v2600 = vcombine.low %v1365, %v1369
    %v2601 = vcombine.low %v1373, %v1377
    %v2602 = vcombine.low %v1381, %v1385
    %v2604 = vunpack.c.l.s4 1966171168
    %v2605 = vunpack.c.0.s8 %v2604
    %v2606 = vlaneseq
    %v2607 = vshrl.u32 %v2606, 7
    %v2608 = vsub.s32 %v2605, %v2607
    %v2609 = vrot.slane %v2599, %v2608
    %v2611 = vunpack.c.l.s4 1966171168
    %v2612 = vunpack.c.0.s8 %v2611
    %v2613 = vlaneseq
    %v2614 = vshrl.u32 %v2613, 7
    %v2615 = vsub.s32 %v2612, %v2614
    %v2616 = vrot.slane %v2600, %v2615
    %v2618 = vunpack.c.l.s4 1966171168
    %v2619 = vunpack.c.0.s8 %v2618
    %v2620 = vlaneseq
    %v2621 = vshrl.u32 %v2620, 7
    %v2622 = vsub.s32 %v2619, %v2621
    %v2623 = vrot.slane %v2601, %v2622
    %v2625 = vunpack.c.l.s4 1966171168
    %v2626 = vunpack.c.0.s8 %v2625
    %v2627 = vlaneseq
    %v2628 = vshrl.u32 %v2627, 7
    %v2629 = vsub.s32 %v2626, %v2628
    %v2630 = vrot.slane %v2602, %v2629
    %v2631 = vcombine.low %v2609, %v2616
    %v2632 = vcombine.low %v2623, %v2630
    %v2634 = vunpack.c.l.s4 1966171168
    %v2635 = vunpack.c.0.s8 %v2634
    %v2636 = vlaneseq
    %v2637 = vshrl.u32 %v2636, 7
    %v2638 = vsub.s32 %v2635, %v2637
    %v2639 = vrot.slane %v2631, %v2638
    %v2641 = vunpack.c.l.s4 1966171168
    %v2642 = vunpack.c.0.s8 %v2641
    %v2643 = vlaneseq
    %v2644 = vshrl.u32 %v2643, 7
    %v2645 = vsub.s32 %v2642, %v2644
    %v2646 = vrot.slane %v2632, %v2645
    %v2647 = vcombine.low %v2639, %v2646
    %v2648 = vcombine.low %v1389, %v1393
    %v2649 = vcombine.low %v1397, %v1401
    %v2650 = vcombine.low %v1405, %v1409
    %v2651 = vcombine.low %v1413, %v1417
    %v2653 = vunpack.c.l.s4 1966171168
    %v2654 = vunpack.c.0.s8 %v2653
    %v2655 = vlaneseq
    %v2656 = vshrl.u32 %v2655, 7
    %v2657 = vsub.s32 %v2654, %v2656
    %v2658 = vrot.slane %v2648, %v2657
    %v2660 = vunpack.c.l.s4 1966171168
    %v2661 = vunpack.c.0.s8 %v2660
    %v2662 = vlaneseq
    %v2663 = vshrl.u32 %v2662, 7
    %v2664 = vsub.s32 %v2661, %v2663
    %v2665 = vrot.slane %v2649, %v2664
    %v2667 = vunpack.c.l.s4 1966171168
    %v2668 = vunpack.c.0.s8 %v2667
    %v2669 = vlaneseq
    %v2670 = vshrl.u32 %v2669, 7
    %v2671 = vsub.s32 %v2668, %v2670
    %v2672 = vrot.slane %v2650, %v2671
    %v2674 = vunpack.c.l.s4 1966171168
    %v2675 = vunpack.c.0.s8 %v2674
    %v2676 = vlaneseq
    %v2677 = vshrl.u32 %v2676, 7
    %v2678 = vsub.s32 %v2675, %v2677
    %v2679 = vrot.slane %v2651, %v2678
    %v2680 = vcombine.low %v2658, %v2665
    %v2681 = vcombine.low %v2672, %v2679
    %v2683 = vunpack.c.l.s4 1966171168
    %v2684 = vunpack.c.0.s8 %v2683
    %v2685 = vlaneseq
    %v2686 = vshrl.u32 %v2685, 7
    %v2687 = vsub.s32 %v2684, %v2686
    %v2688 = vrot.slane %v2680, %v2687
    %v2690 = vunpack.c.l.s4 1966171168
    %v2691 = vunpack.c.0.s8 %v2690
    %v2692 = vlaneseq
    %v2693 = vshrl.u32 %v2692, 7
    %v2694 = vsub.s32 %v2691, %v2693
    %v2695 = vrot.slane %v2681, %v2694
    %v2696 = vcombine.low %v2688, %v2695
    %v2697 = vcombine.low %v1421, %v1425
    %v2698 = vcombine.low %v1429, %v1433
    %v2699 = vcombine.low %v1437, %v1441
    %v2700 = vcombine.low %v1445, %v1449
    %v2702 = vunpack.c.l.s4 1966171168
    %v2703 = vunpack.c.0.s8 %v2702
    %v2704 = vlaneseq
    %v2705 = vshrl.u32 %v2704, 7
    %v2706 = vsub.s32 %v2703, %v2705
    %v2707 = vrot.slane %v2697, %v2706
    %v2709 = vunpack.c.l.s4 1966171168
    %v2710 = vunpack.c.0.s8 %v2709
    %v2711 = vlaneseq
    %v2712 = vshrl.u32 %v2711, 7
    %v2713 = vsub.s32 %v2710, %v2712
    %v2714 = vrot.slane %v2698, %v2713
    %v2716 = vunpack.c.l.s4 1966171168
    %v2717 = vunpack.c.0.s8 %v2716
    %v2718 = vlaneseq
    %v2719 = vshrl.u32 %v2718, 7
    %v2720 = vsub.s32 %v2717, %v2719
    %v2721 = vrot.slane %v2699, %v2720
    %v2723 = vunpack.c.l.s4 1966171168
    %v2724 = vunpack.c.0.s8 %v2723
    %v2725 = vlaneseq
    %v2726 = vshrl.u32 %v2725, 7
    %v2727 = vsub.s32 %v2724, %v2726
    %v2728 = vrot.slane %v2700, %v2727
    %v2729 = vcombine.low %v2707, %v2714
    %v2730 = vcombine.low %v2721, %v2728
    %v2732 = vunpack.c.l.s4 1966171168
    %v2733 = vunpack.c.0.s8 %v2732
    %v2734 = vlaneseq
    %v2735 = vshrl.u32 %v2734, 7
    %v2736 = vsub.s32 %v2733, %v2735
    %v2737 = vrot.slane %v2729, %v2736
    %v2739 = vunpack.c.l.s4 1966171168
    %v2740 = vunpack.c.0.s8 %v2739
    %v2741 = vlaneseq
    %v2742 = vshrl.u32 %v2741, 7
    %v2743 = vsub.s32 %v2740, %v2742
    %v2744 = vrot.slane %v2730, %v2743
    %v2745 = vcombine.low %v2737, %v2744
    %v2746 = vcombine.low %v1453, %v1457
    %v2747 = vcombine.low %v1461, %v1465
    %v2748 = vcombine.low %v1469, %v1473
    %v2749 = vcombine.low %v1477, %v1481
    %v2751 = vunpack.c.l.s4 1966171168
    %v2752 = vunpack.c.0.s8 %v2751
    %v2753 = vlaneseq
    %v2754 = vshrl.u32 %v2753, 7
    %v2755 = vsub.s32 %v2752, %v2754
    %v2756 = vrot.slane %v2746, %v2755
    %v2758 = vunpack.c.l.s4 1966171168
    %v2759 = vunpack.c.0.s8 %v2758
    %v2760 = vlaneseq
    %v2761 = vshrl.u32 %v2760, 7
    %v2762 = vsub.s32 %v2759, %v2761
    %v2763 = vrot.slane %v2747, %v2762
    %v2765 = vunpack.c.l.s4 1966171168
    %v2766 = vunpack.c.0.s8 %v2765
    %v2767 = vlaneseq
    %v2768 = vshrl.u32 %v2767, 7
    %v2769 = vsub.s32 %v2766, %v2768
    %v2770 = vrot.slane %v2748, %v2769
    %v2772 = vunpack.c.l.s4 1966171168
    %v2773 = vunpack.c.0.s8 %v2772
    %v2774 = vlaneseq
    %v2775 = vshrl.u32 %v2774, 7
    %v2776 = vsub.s32 %v2773, %v2775
    %v2777 = vrot.slane %v2749, %v2776
    %v2778 = vcombine.low %v2756, %v2763
    %v2779 = vcombine.low %v2770, %v2777
    %v2781 = vunpack.c.l.s4 1966171168
    %v2782 = vunpack.c.0.s8 %v2781
    %v2783 = vlaneseq
    %v2784 = vshrl.u32 %v2783, 7
    %v2785 = vsub.s32 %v2782, %v2784
    %v2786 = vrot.slane %v2778, %v2785
    %v2788 = vunpack.c.l.s4 1966171168
    %v2789 = vunpack.c.0.s8 %v2788
    %v2790 = vlaneseq
    %v2791 = vshrl.u32 %v2790, 7
    %v2792 = vsub.s32 %v2789, %v2791
    %v2793 = vrot.slane %v2779, %v2792
    %v2794 = vcombine.low %v2786, %v2793
    %v2795 = vcombine.low %v1485, %v1489
    %v2796 = vcombine.low %v1493, %v1497
    %v2797 = vcombine.low %v1501, %v1505
    %v2798 = vcombine.low %v1509, %v1513
    %v2800 = vunpack.c.l.s4 1966171168
    %v2801 = vunpack.c.0.s8 %v2800
    %v2802 = vlaneseq
    %v2803 = vshrl.u32 %v2802, 7
    %v2804 = vsub.s32 %v2801, %v2803
    %v2805 = vrot.slane %v2795, %v2804
    %v2807 = vunpack.c.l.s4 1966171168
    %v2808 = vunpack.c.0.s8 %v2807
    %v2809 = vlaneseq
    %v2810 = vshrl.u32 %v2809, 7
    %v2811 = vsub.s32 %v2808, %v2810
    %v2812 = vrot.slane %v2796, %v2811
    %v2814 = vunpack.c.l.s4 1966171168
    %v2815 = vunpack.c.0.s8 %v2814
    %v2816 = vlaneseq
    %v2817 = vshrl.u32 %v2816, 7
    %v2818 = vsub.s32 %v2815, %v2817
    %v2819 = vrot.slane %v2797, %v2818
    %v2821 = vunpack.c.l.s4 1966171168
    %v2822 = vunpack.c.0.s8 %v2821
    %v2823 = vlaneseq
    %v2824 = vshrl.u32 %v2823, 7
    %v2825 = vsub.s32 %v2822, %v2824
    %v2826 = vrot.slane %v2798, %v2825
    %v2827 = vcombine.low %v2805, %v2812
    %v2828 = vcombine.low %v2819, %v2826
    %v2830 = vunpack.c.l.s4 1966171168
    %v2831 = vunpack.c.0.s8 %v2830
    %v2832 = vlaneseq
    %v2833 = vshrl.u32 %v2832, 7
    %v2834 = vsub.s32 %v2831, %v2833
    %v2835 = vrot.slane %v2827, %v2834
    %v2837 = vunpack.c.l.s4 1966171168
    %v2838 = vunpack.c.0.s8 %v2837
    %v2839 = vlaneseq
    %v2840 = vshrl.u32 %v2839, 7
    %v2841 = vsub.s32 %v2838, %v2840
    %v2842 = vrot.slane %v2828, %v2841
    %v2843 = vcombine.low %v2835, %v2842
    %v2844 = vcombine.low %v1517, %v1521
    %v2845 = vcombine.low %v1525, %v1529
    %v2846 = vcombine.low %v1533, %v1537
    %v2847 = vcombine.low %v1541, %v1545
    %v2849 = vunpack.c.l.s4 1966171168
    %v2850 = vunpack.c.0.s8 %v2849
    %v2851 = vlaneseq
    %v2852 = vshrl.u32 %v2851, 7
    %v2853 = vsub.s32 %v2850, %v2852
    %v2854 = vrot.slane %v2844, %v2853
    %v2856 = vunpack.c.l.s4 1966171168
    %v2857 = vunpack.c.0.s8 %v2856
    %v2858 = vlaneseq
    %v2859 = vshrl.u32 %v2858, 7
    %v2860 = vsub.s32 %v2857, %v2859
    %v2861 = vrot.slane %v2845, %v2860
    %v2863 = vunpack.c.l.s4 1966171168
    %v2864 = vunpack.c.0.s8 %v2863
    %v2865 = vlaneseq
    %v2866 = vshrl.u32 %v2865, 7
    %v2867 = vsub.s32 %v2864, %v2866
    %v2868 = vrot.slane %v2846, %v2867
    %v2870 = vunpack.c.l.s4 1966171168
    %v2871 = vunpack.c.0.s8 %v2870
    %v2872 = vlaneseq
    %v2873 = vshrl.u32 %v2872, 7
    %v2874 = vsub.s32 %v2871, %v2873
    %v2875 = vrot.slane %v2847, %v2874
    %v2876 = vcombine.low %v2854, %v2861
    %v2877 = vcombine.low %v2868, %v2875
    %v2879 = vunpack.c.l.s4 1966171168
    %v2880 = vunpack.c.0.s8 %v2879
    %v2881 = vlaneseq
    %v2882 = vshrl.u32 %v2881, 7
    %v2883 = vsub.s32 %v2880, %v2882
    %v2884 = vrot.slane %v2876, %v2883
    %v2886 = vunpack.c.l.s4 1966171168
    %v2887 = vunpack.c.0.s8 %v2886
    %v2888 = vlaneseq
    %v2889 = vshrl.u32 %v2888, 7
    %v2890 = vsub.s32 %v2887, %v2889
    %v2891 = vrot.slane %v2877, %v2890
    %v2892 = vcombine.low %v2884, %v2891
    %v2893 = vcombine.low %v1549, %v1553
    %v2894 = vcombine.low %v1557, %v1561
    %v2895 = vcombine.low %v1565, %v1569
    %v2896 = vcombine.low %v1573, %v1577
    %v2898 = vunpack.c.l.s4 1966171168
    %v2899 = vunpack.c.0.s8 %v2898
    %v2900 = vlaneseq
    %v2901 = vshrl.u32 %v2900, 7
    %v2902 = vsub.s32 %v2899, %v2901
    %v2903 = vrot.slane %v2893, %v2902
    %v2905 = vunpack.c.l.s4 1966171168
    %v2906 = vunpack.c.0.s8 %v2905
    %v2907 = vlaneseq
    %v2908 = vshrl.u32 %v2907, 7
    %v2909 = vsub.s32 %v2906, %v2908
    %v2910 = vrot.slane %v2894, %v2909
    %v2912 = vunpack.c.l.s4 1966171168
    %v2913 = vunpack.c.0.s8 %v2912
    %v2914 = vlaneseq
    %v2915 = vshrl.u32 %v2914, 7
    %v2916 = vsub.s32 %v2913, %v2915
    %v2917 = vrot.slane %v2895, %v2916
    %v2919 = vunpack.c.l.s4 1966171168
    %v2920 = vunpack.c.0.s8 %v2919
    %v2921 = vlaneseq
    %v2922 = vshrl.u32 %v2921, 7
    %v2923 = vsub.s32 %v2920, %v2922
    %v2924 = vrot.slane %v2896, %v2923
    %v2925 = vcombine.low %v2903, %v2910
    %v2926 = vcombine.low %v2917, %v2924
    %v2928 = vunpack.c.l.s4 1966171168
    %v2929 = vunpack.c.0.s8 %v2928
    %v2930 = vlaneseq
    %v2931 = vshrl.u32 %v2930, 7
    %v2932 = vsub.s32 %v2929, %v2931
    %v2933 = vrot.slane %v2925, %v2932
    %v2935 = vunpack.c.l.s4 1966171168
    %v2936 = vunpack.c.0.s8 %v2935
    %v2937 = vlaneseq
    %v2938 = vshrl.u32 %v2937, 7
    %v2939 = vsub.s32 %v2936, %v2938
    %v2940 = vrot.slane %v2926, %v2939
    %v2941 = vcombine.low %v2933, %v2940
    %v2942 = vcombine.low %v1581, %v1585
    %v2943 = vcombine.low %v1589, %v1593
    %v2944 = vcombine.low %v1597, %v1601
    %v2945 = vcombine.low %v1605, %v1609
    %v2947 = vunpack.c.l.s4 1966171168
    %v2948 = vunpack.c.0.s8 %v2947
    %v2949 = vlaneseq
    %v2950 = vshrl.u32 %v2949, 7
    %v2951 = vsub.s32 %v2948, %v2950
    %v2952 = vrot.slane %v2942, %v2951
    %v2954 = vunpack.c.l.s4 1966171168
    %v2955 = vunpack.c.0.s8 %v2954
    %v2956 = vlaneseq
    %v2957 = vshrl.u32 %v2956, 7
    %v2958 = vsub.s32 %v2955, %v2957
    %v2959 = vrot.slane %v2943, %v2958
    %v2961 = vunpack.c.l.s4 1966171168
    %v2962 = vunpack.c.0.s8 %v2961
    %v2963 = vlaneseq
    %v2964 = vshrl.u32 %v2963, 7
    %v2965 = vsub.s32 %v2962, %v2964
    %v2966 = vrot.slane %v2944, %v2965
    %v2968 = vunpack.c.l.s4 1966171168
    %v2969 = vunpack.c.0.s8 %v2968
    %v2970 = vlaneseq
    %v2971 = vshrl.u32 %v2970, 7
    %v2972 = vsub.s32 %v2969, %v2971
    %v2973 = vrot.slane %v2945, %v2972
    %v2974 = vcombine.low %v2952, %v2959
    %v2975 = vcombine.low %v2966, %v2973
    %v2977 = vunpack.c.l.s4 1966171168
    %v2978 = vunpack.c.0.s8 %v2977
    %v2979 = vlaneseq
    %v2980 = vshrl.u32 %v2979, 7
    %v2981 = vsub.s32 %v2978, %v2980
    %v2982 = vrot.slane %v2974, %v2981
    %v2984 = vunpack.c.l.s4 1966171168
    %v2985 = vunpack.c.0.s8 %v2984
    %v2986 = vlaneseq
    %v2987 = vshrl.u32 %v2986, 7
    %v2988 = vsub.s32 %v2985, %v2987
    %v2989 = vrot.slane %v2975, %v2988
    %v2990 = vcombine.low %v2982, %v2989
    %v2991 = vcombine.low %v1613, %v1617
    %v2992 = vcombine.low %v1621, %v1625
    %v2993 = vcombine.low %v1629, %v1633
    %v2994 = vcombine.low %v1637, %v1641
    %v2996 = vunpack.c.l.s4 1966171168
    %v2997 = vunpack.c.0.s8 %v2996
    %v2998 = vlaneseq
    %v2999 = vshrl.u32 %v2998, 7
    %v3000 = vsub.s32 %v2997, %v2999
    %v3001 = vrot.slane %v2991, %v3000
    %v3003 = vunpack.c.l.s4 1966171168
    %v3004 = vunpack.c.0.s8 %v3003
    %v3005 = vlaneseq
    %v3006 = vshrl.u32 %v3005, 7
    %v3007 = vsub.s32 %v3004, %v3006
    %v3008 = vrot.slane %v2992, %v3007
    %v3010 = vunpack.c.l.s4 1966171168
    %v3011 = vunpack.c.0.s8 %v3010
    %v3012 = vlaneseq
    %v3013 = vshrl.u32 %v3012, 7
    %v3014 = vsub.s32 %v3011, %v3013
    %v3015 = vrot.slane %v2993, %v3014
    %v3017 = vunpack.c.l.s4 1966171168
    %v3018 = vunpack.c.0.s8 %v3017
    %v3019 = vlaneseq
    %v3020 = vshrl.u32 %v3019, 7
    %v3021 = vsub.s32 %v3018, %v3020
    %v3022 = vrot.slane %v2994, %v3021
    %v3023 = vcombine.low %v3001, %v3008
    %v3024 = vcombine.low %v3015, %v3022
    %v3026 = vunpack.c.l.s4 1966171168
    %v3027 = vunpack.c.0.s8 %v3026
    %v3028 = vlaneseq
    %v3029 = vshrl.u32 %v3028, 7
    %v3030 = vsub.s32 %v3027, %v3029
    %v3031 = vrot.slane %v3023, %v3030
    %v3033 = vunpack.c.l.s4 1966171168
    %v3034 = vunpack.c.0.s8 %v3033
    %v3035 = vlaneseq
    %v3036 = vshrl.u32 %v3035, 7
    %v3037 = vsub.s32 %v3034, %v3036
    %v3038 = vrot.slane %v3024, %v3037
    %v3039 = vcombine.low %v3031, %v3038
    %v3040 = vcombine.low %v1645, %v1649
    %v3041 = vcombine.low %v1653, %v1657
    %v3042 = vcombine.low %v1661, %v1665
    %v3043 = vcombine.low %v1669, %v1673
    %v3045 = vunpack.c.l.s4 1966171168
    %v3046 = vunpack.c.0.s8 %v3045
    %v3047 = vlaneseq
    %v3048 = vshrl.u32 %v3047, 7
    %v3049 = vsub.s32 %v3046, %v3048
    %v3050 = vrot.slane %v3040, %v3049
    %v3052 = vunpack.c.l.s4 1966171168
    %v3053 = vunpack.c.0.s8 %v3052
    %v3054 = vlaneseq
    %v3055 = vshrl.u32 %v3054, 7
    %v3056 = vsub.s32 %v3053, %v3055
    %v3057 = vrot.slane %v3041, %v3056
    %v3059 = vunpack.c.l.s4 1966171168
    %v3060 = vunpack.c.0.s8 %v3059
    %v3061 = vlaneseq
    %v3062 = vshrl.u32 %v3061, 7
    %v3063 = vsub.s32 %v3060, %v3062
    %v3064 = vrot.slane %v3042, %v3063
    %v3066 = vunpack.c.l.s4 1966171168
    %v3067 = vunpack.c.0.s8 %v3066
    %v3068 = vlaneseq
    %v3069 = vshrl.u32 %v3068, 7
    %v3070 = vsub.s32 %v3067, %v3069
    %v3071 = vrot.slane %v3043, %v3070
    %v3072 = vcombine.low %v3050, %v3057
    %v3073 = vcombine.low %v3064, %v3071
    %v3075 = vunpack.c.l.s4 1966171168
    %v3076 = vunpack.c.0.s8 %v3075
    %v3077 = vlaneseq
    %v3078 = vshrl.u32 %v3077, 7
    %v3079 = vsub.s32 %v3076, %v3078
    %v3080 = vrot.slane %v3072, %v3079
    %v3082 = vunpack.c.l.s4 1966171168
    %v3083 = vunpack.c.0.s8 %v3082
    %v3084 = vlaneseq
    %v3085 = vshrl.u32 %v3084, 7
    %v3086 = vsub.s32 %v3083, %v3085
    %v3087 = vrot.slane %v3073, %v3086
    %v3088 = vcombine.low %v3080, %v3087
    %v3089 = vcombine.low %v1677, %v1681
    %v3090 = vcombine.low %v1685, %v1689
    %v3091 = vcombine.low %v1693, %v1697
    %v3092 = vcombine.low %v1701, %v1705
    %v3094 = vunpack.c.l.s4 1966171168
    %v3095 = vunpack.c.0.s8 %v3094
    %v3096 = vlaneseq
    %v3097 = vshrl.u32 %v3096, 7
    %v3098 = vsub.s32 %v3095, %v3097
    %v3099 = vrot.slane %v3089, %v3098
    %v3101 = vunpack.c.l.s4 1966171168
    %v3102 = vunpack.c.0.s8 %v3101
    %v3103 = vlaneseq
    %v3104 = vshrl.u32 %v3103, 7
    %v3105 = vsub.s32 %v3102, %v3104
    %v3106 = vrot.slane %v3090, %v3105
    %v3108 = vunpack.c.l.s4 1966171168
    %v3109 = vunpack.c.0.s8 %v3108
    %v3110 = vlaneseq
    %v3111 = vshrl.u32 %v3110, 7
    %v3112 = vsub.s32 %v3109, %v3111
    %v3113 = vrot.slane %v3091, %v3112
    %v3115 = vunpack.c.l.s4 1966171168
    %v3116 = vunpack.c.0.s8 %v3115
    %v3117 = vlaneseq
    %v3118 = vshrl.u32 %v3117, 7
    %v3119 = vsub.s32 %v3116, %v3118
    %v3120 = vrot.slane %v3092, %v3119
    %v3121 = vcombine.low %v3099, %v3106
    %v3122 = vcombine.low %v3113, %v3120
    %v3124 = vunpack.c.l.s4 1966171168
    %v3125 = vunpack.c.0.s8 %v3124
    %v3126 = vlaneseq
    %v3127 = vshrl.u32 %v3126, 7
    %v3128 = vsub.s32 %v3125, %v3127
    %v3129 = vrot.slane %v3121, %v3128
    %v3131 = vunpack.c.l.s4 1966171168
    %v3132 = vunpack.c.0.s8 %v3131
    %v3133 = vlaneseq
    %v3134 = vshrl.u32 %v3133, 7
    %v3135 = vsub.s32 %v3132, %v3134
    %v3136 = vrot.slane %v3122, %v3135
    %v3137 = vcombine.low %v3129, %v3136
    %v3138 = vcombine.low %v1709, %v1713
    %v3139 = vcombine.low %v1717, %v1721
    %v3140 = vcombine.low %v1725, %v1729
    %v3141 = vcombine.low %v1733, %v1737
    %v3143 = vunpack.c.l.s4 1966171168
    %v3144 = vunpack.c.0.s8 %v3143
    %v3145 = vlaneseq
    %v3146 = vshrl.u32 %v3145, 7
    %v3147 = vsub.s32 %v3144, %v3146
    %v3148 = vrot.slane %v3138, %v3147
    %v3150 = vunpack.c.l.s4 1966171168
    %v3151 = vunpack.c.0.s8 %v3150
    %v3152 = vlaneseq
    %v3153 = vshrl.u32 %v3152, 7
    %v3154 = vsub.s32 %v3151, %v3153
    %v3155 = vrot.slane %v3139, %v3154
    %v3157 = vunpack.c.l.s4 1966171168
    %v3158 = vunpack.c.0.s8 %v3157
    %v3159 = vlaneseq
    %v3160 = vshrl.u32 %v3159, 7
    %v3161 = vsub.s32 %v3158, %v3160
    %v3162 = vrot.slane %v3140, %v3161
    %v3164 = vunpack.c.l.s4 1966171168
    %v3165 = vunpack.c.0.s8 %v3164
    %v3166 = vlaneseq
    %v3167 = vshrl.u32 %v3166, 7
    %v3168 = vsub.s32 %v3165, %v3167
    %v3169 = vrot.slane %v3141, %v3168
    %v3170 = vcombine.low %v3148, %v3155
    %v3171 = vcombine.low %v3162, %v3169
    %v3173 = vunpack.c.l.s4 1966171168
    %v3174 = vunpack.c.0.s8 %v3173
    %v3175 = vlaneseq
    %v3176 = vshrl.u32 %v3175, 7
    %v3177 = vsub.s32 %v3174, %v3176
    %v3178 = vrot.slane %v3170, %v3177
    %v3180 = vunpack.c.l.s4 1966171168
    %v3181 = vunpack.c.0.s8 %v3180
    %v3182 = vlaneseq
    %v3183 = vshrl.u32 %v3182, 7
    %v3184 = vsub.s32 %v3181, %v3183
    %v3185 = vrot.slane %v3171, %v3184
    %v3186 = vcombine.low %v3178, %v3185
    %v3187 = vcombine.low %v1741, %v1745
    %v3188 = vcombine.low %v1749, %v1753
    %v3189 = vcombine.low %v1757, %v1761
    %v3190 = vcombine.low %v1765, %v1769
    %v3192 = vunpack.c.l.s4 1966171168
    %v3193 = vunpack.c.0.s8 %v3192
    %v3194 = vlaneseq
    %v3195 = vshrl.u32 %v3194, 7
    %v3196 = vsub.s32 %v3193, %v3195
    %v3197 = vrot.slane %v3187, %v3196
    %v3199 = vunpack.c.l.s4 1966171168
    %v3200 = vunpack.c.0.s8 %v3199
    %v3201 = vlaneseq
    %v3202 = vshrl.u32 %v3201, 7
    %v3203 = vsub.s32 %v3200, %v3202
    %v3204 = vrot.slane %v3188, %v3203
    %v3206 = vunpack.c.l.s4 1966171168
    %v3207 = vunpack.c.0.s8 %v3206
    %v3208 = vlaneseq
    %v3209 = vshrl.u32 %v3208, 7
    %v3210 = vsub.s32 %v3207, %v3209
    %v3211 = vrot.slane %v3189, %v3210
    %v3213 = vunpack.c.l.s4 1966171168
    %v3214 = vunpack.c.0.s8 %v3213
    %v3215 = vlaneseq
    %v3216 = vshrl.u32 %v3215, 7
    %v3217 = vsub.s32 %v3214, %v3216
    %v3218 = vrot.slane %v3190, %v3217
    %v3219 = vcombine.low %v3197, %v3204
    %v3220 = vcombine.low %v3211, %v3218
    %v3222 = vunpack.c.l.s4 1966171168
    %v3223 = vunpack.c.0.s8 %v3222
    %v3224 = vlaneseq
    %v3225 = vshrl.u32 %v3224, 7
    %v3226 = vsub.s32 %v3223, %v3225
    %v3227 = vrot.slane %v3219, %v3226
    %v3229 = vunpack.c.l.s4 1966171168
    %v3230 = vunpack.c.0.s8 %v3229
    %v3231 = vlaneseq
    %v3232 = vshrl.u32 %v3231, 7
    %v3233 = vsub.s32 %v3230, %v3232
    %v3234 = vrot.slane %v3220, %v3233
    %v3235 = vcombine.low %v3227, %v3234
    %v3236 = vcombine.low %v1773, %v1777
    %v3237 = vcombine.low %v1781, %v1785
    %v3238 = vcombine.low %v1789, %v1793
    %v3239 = vcombine.low %v1797, %v1801
    %v3241 = vunpack.c.l.s4 1966171168
    %v3242 = vunpack.c.0.s8 %v3241
    %v3243 = vlaneseq
    %v3244 = vshrl.u32 %v3243, 7
    %v3245 = vsub.s32 %v3242, %v3244
    %v3246 = vrot.slane %v3236, %v3245
    %v3248 = vunpack.c.l.s4 1966171168
    %v3249 = vunpack.c.0.s8 %v3248
    %v3250 = vlaneseq
    %v3251 = vshrl.u32 %v3250, 7
    %v3252 = vsub.s32 %v3249, %v3251
    %v3253 = vrot.slane %v3237, %v3252
    %v3255 = vunpack.c.l.s4 1966171168
    %v3256 = vunpack.c.0.s8 %v3255
    %v3257 = vlaneseq
    %v3258 = vshrl.u32 %v3257, 7
    %v3259 = vsub.s32 %v3256, %v3258
    %v3260 = vrot.slane %v3238, %v3259
    %v3262 = vunpack.c.l.s4 1966171168
    %v3263 = vunpack.c.0.s8 %v3262
    %v3264 = vlaneseq
    %v3265 = vshrl.u32 %v3264, 7
    %v3266 = vsub.s32 %v3263, %v3265
    %v3267 = vrot.slane %v3239, %v3266
    %v3268 = vcombine.low %v3246, %v3253
    %v3269 = vcombine.low %v3260, %v3267
    %v3271 = vunpack.c.l.s4 1966171168
    %v3272 = vunpack.c.0.s8 %v3271
    %v3273 = vlaneseq
    %v3274 = vshrl.u32 %v3273, 7
    %v3275 = vsub.s32 %v3272, %v3274
    %v3276 = vrot.slane %v3268, %v3275
    %v3278 = vunpack.c.l.s4 1966171168
    %v3279 = vunpack.c.0.s8 %v3278
    %v3280 = vlaneseq
    %v3281 = vshrl.u32 %v3280, 7
    %v3282 = vsub.s32 %v3279, %v3281
    %v3283 = vrot.slane %v3269, %v3282
    %v3284 = vcombine.low %v3276, %v3283
    %v3285 = vcombine.low %v1805, %v1809
    %v3286 = vcombine.low %v1813, %v1817
    %v3287 = vcombine.low %v1821, %v1825
    %v3288 = vcombine.low %v1829, %v1833
    %v3290 = vunpack.c.l.s4 1966171168
    %v3291 = vunpack.c.0.s8 %v3290
    %v3292 = vlaneseq
    %v3293 = vshrl.u32 %v3292, 7
    %v3294 = vsub.s32 %v3291, %v3293
    %v3295 = vrot.slane %v3285, %v3294
    %v3297 = vunpack.c.l.s4 1966171168
    %v3298 = vunpack.c.0.s8 %v3297
    %v3299 = vlaneseq
    %v3300 = vshrl.u32 %v3299, 7
    %v3301 = vsub.s32 %v3298, %v3300
    %v3302 = vrot.slane %v3286, %v3301
    %v3304 = vunpack.c.l.s4 1966171168
    %v3305 = vunpack.c.0.s8 %v3304
    %v3306 = vlaneseq
    %v3307 = vshrl.u32 %v3306, 7
    %v3308 = vsub.s32 %v3305, %v3307
    %v3309 = vrot.slane %v3287, %v3308
    %v3311 = vunpack.c.l.s4 1966171168
    %v3312 = vunpack.c.0.s8 %v3311
    %v3313 = vlaneseq
    %v3314 = vshrl.u32 %v3313, 7
    %v3315 = vsub.s32 %v3312, %v3314
    %v3316 = vrot.slane %v3288, %v3315
    %v3317 = vcombine.low %v3295, %v3302
    %v3318 = vcombine.low %v3309, %v3316
    %v3320 = vunpack.c.l.s4 1966171168
    %v3321 = vunpack.c.0.s8 %v3320
    %v3322 = vlaneseq
    %v3323 = vshrl.u32 %v3322, 7
    %v3324 = vsub.s32 %v3321, %v3323
    %v3325 = vrot.slane %v3317, %v3324
    %v3327 = vunpack.c.l.s4 1966171168
    %v3328 = vunpack.c.0.s8 %v3327
    %v3329 = vlaneseq
    %v3330 = vshrl.u32 %v3329, 7
    %v3331 = vsub.s32 %v3328, %v3330
    %v3332 = vrot.slane %v3318, %v3331
    %v3333 = vcombine.low %v3325, %v3332
    %v3334 = vcombine.low %v1837, %v1841
    %v3335 = vcombine.low %v1845, %v1849
    %v3336 = vcombine.low %v1853, %v1857
    %v3337 = vcombine.low %v1861, %v1865
    %v3339 = vunpack.c.l.s4 1966171168
    %v3340 = vunpack.c.0.s8 %v3339
    %v3341 = vlaneseq
    %v3342 = vshrl.u32 %v3341, 7
    %v3343 = vsub.s32 %v3340, %v3342
    %v3344 = vrot.slane %v3334, %v3343
    %v3346 = vunpack.c.l.s4 1966171168
    %v3347 = vunpack.c.0.s8 %v3346
    %v3348 = vlaneseq
    %v3349 = vshrl.u32 %v3348, 7
    %v3350 = vsub.s32 %v3347, %v3349
    %v3351 = vrot.slane %v3335, %v3350
    %v3353 = vunpack.c.l.s4 1966171168
    %v3354 = vunpack.c.0.s8 %v3353
    %v3355 = vlaneseq
    %v3356 = vshrl.u32 %v3355, 7
    %v3357 = vsub.s32 %v3354, %v3356
    %v3358 = vrot.slane %v3336, %v3357
    %v3360 = vunpack.c.l.s4 1966171168
    %v3361 = vunpack.c.0.s8 %v3360
    %v3362 = vlaneseq
    %v3363 = vshrl.u32 %v3362, 7
    %v3364 = vsub.s32 %v3361, %v3363
    %v3365 = vrot.slane %v3337, %v3364
    %v3366 = vcombine.low %v3344, %v3351
    %v3367 = vcombine.low %v3358, %v3365
    %v3369 = vunpack.c.l.s4 1966171168
    %v3370 = vunpack.c.0.s8 %v3369
    %v3371 = vlaneseq
    %v3372 = vshrl.u32 %v3371, 7
    %v3373 = vsub.s32 %v3370, %v3372
    %v3374 = vrot.slane %v3366, %v3373
    %v3376 = vunpack.c.l.s4 1966171168
    %v3377 = vunpack.c.0.s8 %v3376
    %v3378 = vlaneseq
    %v3379 = vshrl.u32 %v3378, 7
    %v3380 = vsub.s32 %v3377, %v3379
    %v3381 = vrot.slane %v3367, %v3380
    %v3382 = vcombine.low %v3374, %v3381
    %v3383 = vcombine.low %v1869, %v1873
    %v3384 = vcombine.low %v1877, %v1881
    %v3385 = vcombine.low %v1885, %v1889
    %v3386 = vcombine.low %v1893, %v1897
    %v3388 = vunpack.c.l.s4 1966171168
    %v3389 = vunpack.c.0.s8 %v3388
    %v3390 = vlaneseq
    %v3391 = vshrl.u32 %v3390, 7
    %v3392 = vsub.s32 %v3389, %v3391
    %v3393 = vrot.slane %v3383, %v3392
    %v3395 = vunpack.c.l.s4 1966171168
    %v3396 = vunpack.c.0.s8 %v3395
    %v3397 = vlaneseq
    %v3398 = vshrl.u32 %v3397, 7
    %v3399 = vsub.s32 %v3396, %v3398
    %v3400 = vrot.slane %v3384, %v3399
    %v3402 = vunpack.c.l.s4 1966171168
    %v3403 = vunpack.c.0.s8 %v3402
    %v3404 = vlaneseq
    %v3405 = vshrl.u32 %v3404, 7
    %v3406 = vsub.s32 %v3403, %v3405
    %v3407 = vrot.slane %v3385, %v3406
    %v3409 = vunpack.c.l.s4 1966171168
    %v3410 = vunpack.c.0.s8 %v3409
    %v3411 = vlaneseq
    %v3412 = vshrl.u32 %v3411, 7
    %v3413 = vsub.s32 %v3410, %v3412
    %v3414 = vrot.slane %v3386, %v3413
    %v3415 = vcombine.low %v3393, %v3400
    %v3416 = vcombine.low %v3407, %v3414
    %v3418 = vunpack.c.l.s4 1966171168
    %v3419 = vunpack.c.0.s8 %v3418
    %v3420 = vlaneseq
    %v3421 = vshrl.u32 %v3420, 7
    %v3422 = vsub.s32 %v3419, %v3421
    %v3423 = vrot.slane %v3415, %v3422
    %v3425 = vunpack.c.l.s4 1966171168
    %v3426 = vunpack.c.0.s8 %v3425
    %v3427 = vlaneseq
    %v3428 = vshrl.u32 %v3427, 7
    %v3429 = vsub.s32 %v3426, %v3428
    %v3430 = vrot.slane %v3416, %v3429
    %v3431 = vcombine.low %v3423, %v3430
    %v3432 = vcombine.low %v1901, %v1905
    %v3433 = vcombine.low %v1909, %v1913
    %v3434 = vcombine.low %v1917, %v1921
    %v3435 = vcombine.low %v1925, %v1929
    %v3437 = vunpack.c.l.s4 1966171168
    %v3438 = vunpack.c.0.s8 %v3437
    %v3439 = vlaneseq
    %v3440 = vshrl.u32 %v3439, 7
    %v3441 = vsub.s32 %v3438, %v3440
    %v3442 = vrot.slane %v3432, %v3441
    %v3444 = vunpack.c.l.s4 1966171168
    %v3445 = vunpack.c.0.s8 %v3444
    %v3446 = vlaneseq
    %v3447 = vshrl.u32 %v3446, 7
    %v3448 = vsub.s32 %v3445, %v3447
    %v3449 = vrot.slane %v3433, %v3448
    %v3451 = vunpack.c.l.s4 1966171168
    %v3452 = vunpack.c.0.s8 %v3451
    %v3453 = vlaneseq
    %v3454 = vshrl.u32 %v3453, 7
    %v3455 = vsub.s32 %v3452, %v3454
    %v3456 = vrot.slane %v3434, %v3455
    %v3458 = vunpack.c.l.s4 1966171168
    %v3459 = vunpack.c.0.s8 %v3458
    %v3460 = vlaneseq
    %v3461 = vshrl.u32 %v3460, 7
    %v3462 = vsub.s32 %v3459, %v3461
    %v3463 = vrot.slane %v3435, %v3462
    %v3464 = vcombine.low %v3442, %v3449
    %v3465 = vcombine.low %v3456, %v3463
    %v3467 = vunpack.c.l.s4 1966171168
    %v3468 = vunpack.c.0.s8 %v3467
    %v3469 = vlaneseq
    %v3470 = vshrl.u32 %v3469, 7
    %v3471 = vsub.s32 %v3468, %v3470
    %v3472 = vrot.slane %v3464, %v3471
    %v3474 = vunpack.c.l.s4 1966171168
    %v3475 = vunpack.c.0.s8 %v3474
    %v3476 = vlaneseq
    %v3477 = vshrl.u32 %v3476, 7
    %v3478 = vsub.s32 %v3475, %v3477
    %v3479 = vrot.slane %v3465, %v3478
    %v3480 = vcombine.low %v3472, %v3479
    %v3481 = vcombine.low %v1933, %v1937
    %v3482 = vcombine.low %v1941, %v1945
    %v3483 = vcombine.low %v1949, %v1953
    %v3484 = vcombine.low %v1957, %v1961
    %v3486 = vunpack.c.l.s4 1966171168
    %v3487 = vunpack.c.0.s8 %v3486
    %v3488 = vlaneseq
    %v3489 = vshrl.u32 %v3488, 7
    %v3490 = vsub.s32 %v3487, %v3489
    %v3491 = vrot.slane %v3481, %v3490
    %v3493 = vunpack.c.l.s4 1966171168
    %v3494 = vunpack.c.0.s8 %v3493
    %v3495 = vlaneseq
    %v3496 = vshrl.u32 %v3495, 7
    %v3497 = vsub.s32 %v3494, %v3496
    %v3498 = vrot.slane %v3482, %v3497
    %v3500 = vunpack.c.l.s4 1966171168
    %v3501 = vunpack.c.0.s8 %v3500
    %v3502 = vlaneseq
    %v3503 = vshrl.u32 %v3502, 7
    %v3504 = vsub.s32 %v3501, %v3503
    %v3505 = vrot.slane %v3483, %v3504
    %v3507 = vunpack.c.l.s4 1966171168
    %v3508 = vunpack.c.0.s8 %v3507
    %v3509 = vlaneseq
    %v3510 = vshrl.u32 %v3509, 7
    %v3511 = vsub.s32 %v3508, %v3510
    %v3512 = vrot.slane %v3484, %v3511
    %v3513 = vcombine.low %v3491, %v3498
    %v3514 = vcombine.low %v3505, %v3512
    %v3516 = vunpack.c.l.s4 1966171168
    %v3517 = vunpack.c.0.s8 %v3516
    %v3518 = vlaneseq
    %v3519 = vshrl.u32 %v3518, 7
    %v3520 = vsub.s32 %v3517, %v3519
    %v3521 = vrot.slane %v3513, %v3520
    %v3523 = vunpack.c.l.s4 1966171168
    %v3524 = vunpack.c.0.s8 %v3523
    %v3525 = vlaneseq
    %v3526 = vshrl.u32 %v3525, 7
    %v3527 = vsub.s32 %v3524, %v3526
    %v3528 = vrot.slane %v3514, %v3527
    %v3529 = vcombine.low %v3521, %v3528
    %3530 = vset.pattern.permute.xlu0 0
    %3531 = vperm.xlu0 %3530, %v2010
    %v3532 = vpop.permute.xlu0 %3531
    %3533 = vset.pattern.permute.xlu0 0
    %3534 = vperm.xlu0 %3533, %v2059
    %v3535 = vpop.permute.xlu0 %3534
    %3536 = vset.pattern.permute.xlu0 0
    %3537 = vperm.xlu0 %3536, %v2108
    %v3538 = vpop.permute.xlu0 %3537
    %3539 = vset.pattern.permute.xlu0 0
    %3540 = vperm.xlu0 %3539, %v2157
    %v3541 = vpop.permute.xlu0 %3540
    %3542 = vset.pattern.permute.xlu0 0
    %3543 = vperm.xlu0 %3542, %v2206
    %v3544 = vpop.permute.xlu0 %3543
    %3545 = vset.pattern.permute.xlu0 0
    %3546 = vperm.xlu0 %3545, %v2255
    %v3547 = vpop.permute.xlu0 %3546
    %3548 = vset.pattern.permute.xlu0 0
    %3549 = vperm.xlu0 %3548, %v2304
    %v3550 = vpop.permute.xlu0 %3549
    %3551 = vset.pattern.permute.xlu0 0
    %3552 = vperm.xlu0 %3551, %v2353
    %v3553 = vpop.permute.xlu0 %3552
    %3554 = vset.pattern.permute.xlu0 0
    %3555 = vperm.xlu0 %3554, %v2402
    %v3556 = vpop.permute.xlu0 %3555
    %3557 = vset.pattern.permute.xlu0 0
    %3558 = vperm.xlu0 %3557, %v2451
    %v3559 = vpop.permute.xlu0 %3558
    %3560 = vset.pattern.permute.xlu0 0
    %3561 = vperm.xlu0 %3560, %v2500
    %v3562 = vpop.permute.xlu0 %3561
    %3563 = vset.pattern.permute.xlu0 0
    %3564 = vperm.xlu0 %3563, %v2549
    %v3565 = vpop.permute.xlu0 %3564
    %3566 = vset.pattern.permute.xlu0 0
    %3567 = vperm.xlu0 %3566, %v2598
    %v3568 = vpop.permute.xlu0 %3567
    %3569 = vset.pattern.permute.xlu0 0
    %3570 = vperm.xlu0 %3569, %v2647
    %v3571 = vpop.permute.xlu0 %3570
    %3572 = vset.pattern.permute.xlu0 0
    %3573 = vperm.xlu0 %3572, %v2696
    %v3574 = vpop.permute.xlu0 %3573
    %3575 = vset.pattern.permute.xlu0 0
    %3576 = vperm.xlu0 %3575, %v2745
    %v3577 = vpop.permute.xlu0 %3576
    %3578 = vset.pattern.permute.xlu0 0
    %3579 = vperm.xlu0 %3578, %v2794
    %v3580 = vpop.permute.xlu0 %3579
    %3581 = vset.pattern.permute.xlu0 0
    %3582 = vperm.xlu0 %3581, %v2843
    %v3583 = vpop.permute.xlu0 %3582
    %3584 = vset.pattern.permute.xlu0 0
    %3585 = vperm.xlu0 %3584, %v2892
    %v3586 = vpop.permute.xlu0 %3585
    %3587 = vset.pattern.permute.xlu0 0
    %3588 = vperm.xlu0 %3587, %v2941
    %v3589 = vpop.permute.xlu0 %3588
    %3590 = vset.pattern.permute.xlu0 0
    %3591 = vperm.xlu0 %3590, %v2990
    %v3592 = vpop.permute.xlu0 %3591
    %3593 = vset.pattern.permute.xlu0 0
    %3594 = vperm.xlu0 %3593, %v3039
    %v3595 = vpop.permute.xlu0 %3594
    %3596 = vset.pattern.permute.xlu0 0
    %3597 = vperm.xlu0 %3596, %v3088
    %v3598 = vpop.permute.xlu0 %3597
    %3599 = vset.pattern.permute.xlu0 0
    %3600 = vperm.xlu0 %3599, %v3137
    %v3601 = vpop.permute.xlu0 %3600
    %3602 = vset.pattern.permute.xlu0 0
    %3603 = vperm.xlu0 %3602, %v3186
    %v3604 = vpop.permute.xlu0 %3603
    %3605 = vset.pattern.permute.xlu0 0
    %3606 = vperm.xlu0 %3605, %v3235
    %v3607 = vpop.permute.xlu0 %3606
    %3608 = vset.pattern.permute.xlu0 0
    %3609 = vperm.xlu0 %3608, %v3284
    %v3610 = vpop.permute.xlu0 %3609
    %3611 = vset.pattern.permute.xlu0 0
    %3612 = vperm.xlu0 %3611, %v3333
    %v3613 = vpop.permute.xlu0 %3612
    %3614 = vset.pattern.permute.xlu0 0
    %3615 = vperm.xlu0 %3614, %v3382
    %v3616 = vpop.permute.xlu0 %3615
    %3617 = vset.pattern.permute.xlu0 0
    %3618 = vperm.xlu0 %3617, %v3431
    %v3619 = vpop.permute.xlu0 %3618
    %3620 = vset.pattern.permute.xlu0 0
    %3621 = vperm.xlu0 %3620, %v3480
    %v3622 = vpop.permute.xlu0 %3621
    %3623 = vset.pattern.permute.xlu0 0
    %3624 = vperm.xlu0 %3623, %v3529
    %v3625 = vpop.permute.xlu0 %3624
    %v3626 = vlaneseq
    %v3627 = vand.u32 %v3626, 127
    %v3628 = vlaneseq
    %v3629 = vshrl.u32 %v3628, 7
    %v3630 = vsub.s32 %v3627, %v3629
    %v3631 = vrot.slane %v3532, %v3630
    %v3632 = vadd.s32 %v3627, 4294967288
    %v3633 = vlaneseq
    %v3634 = vshrl.u32 %v3633, 7
    %v3635 = vsub.s32 %v3632, %v3634
    %v3636 = vrot.slane %v3535, %v3635
    %vm3637 = vcmask 130112
    %v3638 = vsel %vm3637, %v3636, %v3631
    %v3639 = vadd.s32 %v3627, 4294967280
    %v3640 = vlaneseq
    %v3641 = vshrl.u32 %v3640, 7
    %v3642 = vsub.s32 %v3639, %v3641
    %v3643 = vrot.slane %v3538, %v3642
    %vm3644 = vcmask 195712
    %v3645 = vsel %vm3644, %v3643, %v3638
    %v3646 = vadd.s32 %v3627, 4294967272
    %v3647 = vlaneseq
    %v3648 = vshrl.u32 %v3647, 7
    %v3649 = vsub.s32 %v3646, %v3648
    %v3650 = vrot.slane %v3541, %v3649
    %vm3651 = vcmask 261312
    %v3652 = vsel %vm3651, %v3650, %v3645
    %v3653 = vadd.s32 %v3627, 4294967264
    %v3654 = vlaneseq
    %v3655 = vshrl.u32 %v3654, 7
    %v3656 = vsub.s32 %v3653, %v3655
    %v3657 = vrot.slane %v3544, %v3656
    %vm3658 = vcmask 326912
    %v3659 = vsel %vm3658, %v3657, %v3652
    %v3660 = vadd.s32 %v3627, 4294967256
    %v3661 = vlaneseq
    %v3662 = vshrl.u32 %v3661, 7
    %v3663 = vsub.s32 %v3660, %v3662
    %v3664 = vrot.slane %v3547, %v3663
    %vm3665 = vcmask 392512
    %v3666 = vsel %vm3665, %v3664, %v3659
    %v3667 = vadd.s32 %v3627, 4294967248
    %v3668 = vlaneseq
    %v3669 = vshrl.u32 %v3668, 7
    %v3670 = vsub.s32 %v3667, %v3669
    %v3671 = vrot.slane %v3550, %v3670
    %vm3672 = vcmask 458112
    %v3673 = vsel %vm3672, %v3671, %v3666
    %v3674 = vadd.s32 %v3627, 4294967240
    %v3675 = vlaneseq
    %v3676 = vshrl.u32 %v3675, 7
    %v3677 = vsub.s32 %v3674, %v3676
    %v3678 = vrot.slane %v3553, %v3677
    %vm3679 = vcmask 523712
    %v3680 = vsel %vm3679, %v3678, %v3673
    %v3681 = vadd.s32 %v3627, 4294967232
    %v3682 = vlaneseq
    %v3683 = vshrl.u32 %v3682, 7
    %v3684 = vsub.s32 %v3681, %v3683
    %v3685 = vrot.slane %v3556, %v3684
    %vm3686 = vcmask 589312
    %v3687 = vsel %vm3686, %v3685, %v3680
    %v3688 = vadd.s32 %v3627, 4294967224
    %v3689 = vlaneseq
    %v3690 = vshrl.u32 %v3689, 7
    %v3691 = vsub.s32 %v3688, %v3690
    %v3692 = vrot.slane %v3559, %v3691
    %vm3693 = vcmask 654912
    %v3694 = vsel %vm3693, %v3692, %v3687
    %v3695 = vadd.s32 %v3627, 4294967216
    %v3696 = vlaneseq
    %v3697 = vshrl.u32 %v3696, 7
    %v3698 = vsub.s32 %v3695, %v3697
    %v3699 = vrot.slane %v3562, %v3698
    %vm3700 = vcmask 720512
    %v3701 = vsel %vm3700, %v3699, %v3694
    %v3702 = vadd.s32 %v3627, 4294967208
    %v3703 = vlaneseq
    %v3704 = vshrl.u32 %v3703, 7
    %v3705 = vsub.s32 %v3702, %v3704
    %v3706 = vrot.slane %v3565, %v3705
    %vm3707 = vcmask 786112
    %v3708 = vsel %vm3707, %v3706, %v3701
    %v3709 = vadd.s32 %v3627, 4294967200
    %v3710 = vlaneseq
    %v3711 = vshrl.u32 %v3710, 7
    %v3712 = vsub.s32 %v3709, %v3711
    %v3713 = vrot.slane %v3568, %v3712
    %vm3714 = vcmask 851712
    %v3715 = vsel %vm3714, %v3713, %v3708
    %v3716 = vadd.s32 %v3627, 4294967192
    %v3717 = vlaneseq
    %v3718 = vshrl.u32 %v3717, 7
    %v3719 = vsub.s32 %v3716, %v3718
    %v3720 = vrot.slane %v3571, %v3719
    %vm3721 = vcmask 917312
    %v3722 = vsel %vm3721, %v3720, %v3715
    %v3723 = vadd.s32 %v3627, 4294967184
    %v3724 = vlaneseq
    %v3725 = vshrl.u32 %v3724, 7
    %v3726 = vsub.s32 %v3723, %v3725
    %v3727 = vrot.slane %v3574, %v3726
    %vm3728 = vcmask 982912
    %v3729 = vsel %vm3728, %v3727, %v3722
    %v3730 = vadd.s32 %v3627, 4294967176
    %v3731 = vlaneseq
    %v3732 = vshrl.u32 %v3731, 7
    %v3733 = vsub.s32 %v3730, %v3732
    %v3734 = vrot.slane %v3577, %v3733
    %vm3735 = vcmask 1048512
    %v3736 = vsel %vm3735, %v3734, %v3729
    %v3737 = vlaneseq
    %v3738 = vshrl.u32 %v3737, 7
    %v3739 = vsub.s32 %v3627, %v3738
    %v3740 = vrot.slane %v3580, %v3739
    %v3741 = vlaneseq
    %v3742 = vshrl.u32 %v3741, 7
    %v3743 = vsub.s32 %v3632, %v3742
    %v3744 = vrot.slane %v3583, %v3743
    %v3745 = vsel %vm3637, %v3744, %v3740
    %v3746 = vlaneseq
    %v3747 = vshrl.u32 %v3746, 7
    %v3748 = vsub.s32 %v3639, %v3747
    %v3749 = vrot.slane %v3586, %v3748
    %v3750 = vsel %vm3644, %v3749, %v3745
    %v3751 = vlaneseq
    %v3752 = vshrl.u32 %v3751, 7
    %v3753 = vsub.s32 %v3646, %v3752
    %v3754 = vrot.slane %v3589, %v3753
    %v3755 = vsel %vm3651, %v3754, %v3750
    %v3756 = vlaneseq
    %v3757 = vshrl.u32 %v3756, 7
    %v3758 = vsub.s32 %v3653, %v3757
    %v3759 = vrot.slane %v3592, %v3758
    %v3760 = vsel %vm3658, %v3759, %v3755
    %v3761 = vlaneseq
    %v3762 = vshrl.u32 %v3761, 7
    %v3763 = vsub.s32 %v3660, %v3762
    %v3764 = vrot.slane %v3595, %v3763
    %v3765 = vsel %vm3665, %v3764, %v3760
    %v3766 = vlaneseq
    %v3767 = vshrl.u32 %v3766, 7
    %v3768 = vsub.s32 %v3667, %v3767
    %v3769 = vrot.slane %v3598, %v3768
    %v3770 = vsel %vm3672, %v3769, %v3765
    %v3771 = vlaneseq
    %v3772 = vshrl.u32 %v3771, 7
    %v3773 = vsub.s32 %v3674, %v3772
    %v3774 = vrot.slane %v3601, %v3773
    %v3775 = vsel %vm3679, %v3774, %v3770
    %v3776 = vlaneseq
    %v3777 = vshrl.u32 %v3776, 7
    %v3778 = vsub.s32 %v3681, %v3777
    %v3779 = vrot.slane %v3604, %v3778
    %v3780 = vsel %vm3686, %v3779, %v3775
    %v3781 = vlaneseq
    %v3782 = vshrl.u32 %v3781, 7
    %v3783 = vsub.s32 %v3688, %v3782
    %v3784 = vrot.slane %v3607, %v3783
    %v3785 = vsel %vm3693, %v3784, %v3780
    %v3786 = vlaneseq
    %v3787 = vshrl.u32 %v3786, 7
    %v3788 = vsub.s32 %v3695, %v3787
    %v3789 = vrot.slane %v3610, %v3788
    %v3790 = vsel %vm3700, %v3789, %v3785
    %v3791 = vlaneseq
    %v3792 = vshrl.u32 %v3791, 7
    %v3793 = vsub.s32 %v3702, %v3792
    %v3794 = vrot.slane %v3613, %v3793
    %v3795 = vsel %vm3707, %v3794, %v3790
    %v3796 = vlaneseq
    %v3797 = vshrl.u32 %v3796, 7
    %v3798 = vsub.s32 %v3709, %v3797
    %v3799 = vrot.slane %v3616, %v3798
    %v3800 = vsel %vm3714, %v3799, %v3795
    %v3801 = vlaneseq
    %v3802 = vshrl.u32 %v3801, 7
    %v3803 = vsub.s32 %v3716, %v3802
    %v3804 = vrot.slane %v3619, %v3803
    %v3805 = vsel %vm3721, %v3804, %v3800
    %v3806 = vlaneseq
    %v3807 = vshrl.u32 %v3806, 7
    %v3808 = vsub.s32 %v3723, %v3807
    %v3809 = vrot.slane %v3622, %v3808
    %v3810 = vsel %vm3728, %v3809, %v3805
    %v3811 = vlaneseq
    %v3812 = vshrl.u32 %v3811, 7
    %v3813 = vsub.s32 %v3730, %v3812
    %v3814 = vrot.slane %v3625, %v3813
    %v3815 = vsel %vm3735, %v3814, %v3810
    %v3816 = vcombine.low %v3736, %v3815
    %v3818 = vunpack.c.l.s4 1966171168
    %v3819 = vunpack.c.0.s8 %v3818
    %v3820 = vlaneseq
    %v3821 = vshrl.u32 %v3820, 7
    %v3822 = vsub.s32 %v3819, %v3821
    %v3823 = vrot.slane %v3816, %v3822
    %v3825 = vunpack.c.l.s4 1966171168
    %v3826 = vunpack.c.0.s8 %v3825
    %v3827 = vlaneseq
    %v3828 = vshrl.u32 %v3827, 7
    %v3829 = vsub.s32 %v3826, %v3828
    %v3830 = vrot.slane %v3823, %v3829
    %v3832 = vlaneseq
    %vm3833 = vcmp.ge.s32.totalorder %v3832, 0
    %vm3834 = vcmp.lt.s32.totalorder %v3832, 256
    %vm3835 = vmand %vm3833, %vm3834
    %3836 = vst.msk [vmem:[#allocation2] sm:$0x3] %vm3835, %v3830
    // Predicated region
    $region6: #{tpu_custom_call.1} parent=1 // pred_check
      _
    $region7: #{tpu_custom_call.1} parent=1 // pred_check_branch
      %3838 = sbr.rel (0) target = $region9
    $region8: #{tpu_custom_call.1} parent=1 // pred_region
      %s3840 = ssub.s32 32, 32
      %3841 = vsyncadd [#allocation3], %s3840
      %s3843 = sshll.u32 [#allocation2], 4
      %s3844 = int_to_ptr.vmem [resolvable:$true] %s3843
      %3846 = dma.vmem_to_hbm [thread:$0]  %s3844, 32, %s1, [#allocation3]
    $region9: #{tpu_custom_call.1} parent=1 // pred_fallthru
      _
    // Predicated region
    $region10: #{tpu_custom_call.1} parent=1 // pred_check
      _
    $region11: #{tpu_custom_call.1} parent=1 // pred_check_branch
      %3848 = sbr.rel (0) target = $region13
    $region12: #{tpu_custom_call.1} parent=1 // pred_region
      %3849 = dma.done [#allocation3], 32
    $region13: #{tpu_custom_call.1} parent=1 // pred_fallthru
      _
    %3850 = vsyncpa [#allocation3], 1

</llo_original>
